<compile_context>
chip_gen: v5e
topology: v5e:2x2
jax: 0.10.0
libtpu: 0.0.40
codegen_flags: <defaults>
</compile_context>

<pallas_src>
import functools

import jax
import jax.numpy as jnp
import numpy as np
from jax.experimental import pallas as pl
from jax.experimental.pallas import tpu as pltpu

VMEM = pltpu.MemorySpace.VMEM

_NEG_SLOPE = 0.01                      # nn.LeakyReLU() default
_VMEM_LIMIT = 48 * 1024 * 1024         # < v7x's 64 MiB/TC; demo needs far less


# --------------------------- shared KernelLayer -------------------------------
def _apply_kernel_layer(x, w_ref, u_ref, vt_ref, b_ref, *, apply_sigmoid,
                        need_reg, lambda_s=0.0, lambda_2=0.0):
  """One KernelLayer: y = act(x @ (W * w_hat) + b); optionally its reg term.

  w_hat / reg / activation math stays in f32 (v5e has no bf16 VPU); the matmul
  feeds the MXU in bf16 with f32 accumulation.
  """
  w = w_ref[...]                                    # (n_in, n_hid) f32
  n_in, n_hid = w.shape
  n_dim = u_ref.shape[1]

  # w_hat[i,j] = relu(1 - ||u_i - v_j||^2), unrolled over the tiny n_dim axis.
  dist_sq = jnp.zeros((n_in, n_hid), jnp.float32)
  for d in range(n_dim):
    diff = u_ref[:, d:d + 1] - vt_ref[d:d + 1, :]   # (n_in,1) - (1,n_hid)
    dist_sq = dist_sq + diff * diff
  w_hat = jnp.maximum(1.0 - dist_sq, 0.0)

  w_eff = w * w_hat
  y = jnp.dot(x.astype(jnp.bfloat16), w_eff.astype(jnp.bfloat16),
              preferred_element_type=jnp.float32) + b_ref[...]
  if apply_sigmoid:
    y = jax.nn.sigmoid(y)

  reg = None
  if need_reg:                 # lambda_s*mse(w_hat,0) + lambda_2*mse(W,0), 'mean'
    inv = 1.0 / float(n_in * n_hid)
    sp = jnp.sum(jnp.sum(w_hat * w_hat, axis=0, keepdims=True),
                 axis=1, keepdims=True) * inv
    l2 = jnp.sum(jnp.sum(w * w, axis=0, keepdims=True),
                 axis=1, keepdims=True) * inv
    reg = lambda_s * sp + lambda_2 * l2
  return y, reg


# ------------------------- fully fused forward kernel -------------------------
def _fused_kernel(xpad_ref, conv_ref, *rest, n_local, n_global, gk_size,
                  dot_scale, lambda_s, lambda_2, n_m, n_u):
  local_refs = rest[:4 * n_local]
  global_refs = rest[4 * n_local:4 * (n_local + n_global)]
  out_ref = rest[4 * (n_local + n_global)]
  reg_ref = rest[4 * (n_local + n_global) + 1]

  # xpad_ref is train_r with a 1-pixel zero border: shape (n_m+2, n_u+2).
  train = xpad_ref[pl.ds(1, n_m), pl.ds(1, n_u)]     # raw train_r interior

  # ---- local KernelNet -------------------------------------------------------
  x = train
  for i in range(n_local):
    w_ref, u_ref, vt_ref, b_ref = local_refs[4 * i:4 * i + 4]
    x, _ = _apply_kernel_layer(x, w_ref, u_ref, vt_ref, b_ref,
                               apply_sigmoid=(i < n_local - 1),
                               need_reg=False)

  # ---- global_kernel: mean over dim 0, (1, n_m) @ (n_m, gk^2) * dot_scale ----
  avg = jnp.sum(x, axis=0, keepdims=True) * (1.0 / float(n_m))
  gk = jnp.dot(avg.astype(jnp.bfloat16), conv_ref[...].astype(jnp.bfloat16),
               preferred_element_type=jnp.float32) * dot_scale   # (1, gk^2)

  # ---- global_conv: 3x3 padding=1 cross-correlation of raw train_r with gk --
  # tap(a,b)[i,j] = train_r[i+a-1, j+b-1] with zero fill == static slice
  # xpad[a:a+n_m, b:b+n_u].  Pure VPU multiply-accumulate: no MXU shift
  # matmuls, no circular wrap.
  acc = jnp.zeros((n_m, n_u), jnp.float32)
  for a in range(gk_size):
    for b in range(gk_size):
      k = gk_size * a + b
      w_ab = gk[0:1, k:k + 1]                        # (1,1) scalar broadcast
      tap = xpad_ref[pl.ds(a, n_m), pl.ds(b, n_u)]
      acc = acc + w_ab * tap
  x = jnp.where(acc > 0, acc, _NEG_SLOPE * acc)      # LeakyReLU(0.01)

  # ---- global KernelNet, reg accumulated in-register, emitted once as (1,1) -
  total_reg = jnp.zeros((1, 1), jnp.float32)
  for i in range(n_global):
    w_ref, u_ref, vt_ref, b_ref = global_refs[4 * i:4 * i + 4]
    x, reg = _apply_kernel_layer(x, w_ref, u_ref, vt_ref, b_ref,
                                 apply_sigmoid=(i < n_global - 1),
                                 need_reg=True,
                                 lambda_s=lambda_s, lambda_2=lambda_2)
    total_reg = total_reg + reg

  out_ref[...] = x
  reg_ref[...] = total_reg


# ------------------------------ CompleteNet ------------------------------------
def _layer_inputs(layer):
  """Flatten one KernelLayer's params into kernel-ready 2D f32 arrays."""
  w = layer["W"]
  n_in, n_hid = w.shape
  n_dim = layer["u"].shape[-1]
  u2 = layer["u"].reshape(n_in, n_dim)
  vt = layer["v"].reshape(n_hid, n_dim).T            # (n_dim, n_hid) layout prep
  b2 = layer["b"].reshape(1, n_hid)
  return [w.astype(jnp.float32), u2.astype(jnp.float32),
          vt.astype(jnp.float32), b2.astype(jnp.float32)]


def complete_net_forward(train_r, params, *, gk_size, dot_scale,
                         lambda_s, lambda_2):
  n_m, n_u = train_r.shape
  assert n_m == n_u, "reference forward requires square train_r (n_u == n_m)"
  assert gk_size == 3, "padding=1 'same' conv in the reference implies gk_size=3"

  local_flat, global_flat = [], []
  for lyr in params["local"]:
    local_flat += _layer_inputs(lyr)
  for lyr in params["global"]:
    global_flat += _layer_inputs(lyr)

  # Wrapper-side zero pad (layout plumbing only): gives the kernel the
  # "same"-conv halo as static-offset VMEM slices.
  xpad = jnp.zeros((n_m + 2, n_u + 2), jnp.float32)
  xpad = xpad.at[1:n_m + 1, 1:n_u + 1].set(train_r.astype(jnp.float32))

  kern = functools.partial(
      _fused_kernel,
      n_local=len(params["local"]), n_global=len(params["global"]),
      gk_size=gk_size, dot_scale=float(dot_scale),
      lambda_s=float(lambda_s), lambda_2=float(lambda_2),
      n_m=n_m, n_u=n_u)

  n_in_arrays = 2 + len(local_flat) + len(global_flat)
  out, reg = pl.pallas_call(
      kern,
      out_shape=(jax.ShapeDtypeStruct((n_m, n_u), jnp.float32),
                 jax.ShapeDtypeStruct((1, 1), jnp.float32)),
      in_specs=[pl.BlockSpec(memory_space=VMEM)] * n_in_arrays,
      out_specs=(pl.BlockSpec(memory_space=VMEM),
                 pl.BlockSpec(memory_space=VMEM)),
      compiler_params=pltpu.CompilerParams(vmem_limit_bytes=_VMEM_LIMIT),
  )(xpad, params["conv_kernel"], *local_flat, *global_flat)
  return out, reg[0, 0]


# ------------------------- pure-JAX reference (check) --------------------------
def _reference_forward(train_r, params, *, gk_size, dot_scale,
                       lambda_s, lambda_2):
  def one_layer(x, lyr, act):
    dist2 = jnp.sum((lyr["u"] - lyr["v"]) ** 2, axis=2)       # (n_in, n_hid)
    w_hat = jnp.clip(1.0 - dist2, 0.0, None)
    reg = lambda_s * jnp.mean(w_hat ** 2) + lambda_2 * jnp.mean(lyr["W"] ** 2)
    w_eff = lyr["W"] * w_hat
    y = jnp.dot(x.astype(jnp.bfloat16), w_eff.astype(jnp.bfloat16),
                preferred_element_type=jnp.float32) + lyr["b"].reshape(1, -1)
    if act:
      y = jax.nn.sigmoid(y)
    return y, reg

  def kernel_net(x, layers):
    total = jnp.float32(0.0)
    for i, lyr in enumerate(layers):
      x, reg = one_layer(x, lyr, act=(i < len(layers) - 1))
      total = total + reg
    return x, total

  n_m, n_u = train_r.shape
  x, _ = kernel_net(train_r, params["local"])
  avg = jnp.mean(x, axis=0).reshape(1, -1)
  gk = (jnp.dot(avg.astype(jnp.bfloat16),
                params["conv_kernel"].astype(jnp.bfloat16),
                preferred_element_type=jnp.float32)
        * dot_scale).reshape(gk_size, gk_size)
  xpad = jnp.pad(train_r, ((1, 1), (1, 1)))
  conv = jnp.zeros((n_m, n_u), jnp.float32)
  for a in range(gk_size):
    for b in range(gk_size):
      conv = conv + gk[a, b] * xpad[a:a + n_m, b:b + n_u]
  x = jnp.where(conv > 0, conv, _NEG_SLOPE * conv)
  x, reg = kernel_net(x, params["global"])
  return x, reg


# ------------------------------ init & demo ------------------------------------
def make_kernel_net_params(key, n_first, n_hid, n_dim, n_layers):
  specs = [(n_first if i == 0 else n_hid, n_hid) for i in range(n_layers)]
  specs.append((n_hid, n_first))        # last layer: n_hid -> n_first, Identity
  layers = []
  for ni, no in specs:
    key, kw, ku, kv = jax.random.split(key, 4)
    bw = np.sqrt(2.0) * np.sqrt(6.0 / (ni + no))   # xavier_uniform, relu gain
    layers.append(dict(
        W=jax.random.uniform(kw, (ni, no), jnp.float32, -bw, bw),
        u=0.1 * jax.random.normal(ku, (ni, 1, n_dim), jnp.float32),
        v=0.1 * jax.random.normal(kv, (1, no, n_dim), jnp.float32),
        b=jnp.zeros((no,), jnp.float32)))
  return layers, key


if __name__ == "__main__":
  # small shapes consistent with the module; forward requires n_u == n_m
  n_m = 16
  n_u = 16
  n_hid = 32
  n_dim = 4
  n_layers = 2
  gk_size = 3
  dot_scale = 1.0
  lambda_s = 0.006
  lambda_2 = 20.0

  key = jax.random.PRNGKey(0)
  key, k_in = jax.random.split(key)
  train_r = jax.random.uniform(k_in, (n_m, n_u), dtype=jnp.float32)

  local_layers, key = make_kernel_net_params(key, n_u, n_hid, n_dim, n_layers)
  global_layers, key = make_kernel_net_params(key, n_m, n_hid, n_dim, n_layers)
  key, kc = jax.random.split(key)
  bc = np.sqrt(2.0) * np.sqrt(6.0 / (n_m + gk_size * gk_size))
  conv_kernel = jax.random.uniform(kc, (n_m, gk_size * gk_size),
                                   jnp.float32, -bc, bc)

  params = {"local": local_layers, "global": global_layers,
            "conv_kernel": conv_kernel}

  fwd = jax.jit(functools.partial(complete_net_forward, gk_size=gk_size,
                                  dot_scale=dot_scale, lambda_s=lambda_s,
                                  lambda_2=lambda_2))
  out, reg = fwd(train_r, params)
  out = jax.block_until_ready(out)
  reg = jax.block_until_ready(reg)

  assert out.shape == (n_m, n_u), out.shape
  assert np.all(np.isfinite(np.asarray(out)))
  assert np.isfinite(float(reg))

  # sanity check against a pure-JAX reference with matching matmul precision
  ref = jax.jit(functools.partial(_reference_forward, gk_size=gk_size,
                                  dot_scale=dot_scale, lambda_s=lambda_s,
                                  lambda_2=lambda_2))
  ref_out, ref_reg = ref(train_r, params)
  np.testing.assert_allclose(np.asarray(out), np.asarray(ref_out),
                             rtol=2e-2, atol=2e-2)
  np.testing.assert_allclose(float(reg), float(ref_reg), rtol=2e-2, atol=2e-2)

  print("KERNEL_OK")
</pallas_src>

<mosaic_0001>
module attributes {stable_mosaic.version = 11 : i64} {
  func.func @_fused_kernel(%arg0: memref<18x18xf32, #tpu.memory_space<vmem>>, %arg1: memref<16x9xf32, #tpu.memory_space<vmem>>, %arg2: memref<16x32xf32, #tpu.memory_space<vmem>>, %arg3: memref<16x4xf32, #tpu.memory_space<vmem>>, %arg4: memref<4x32xf32, #tpu.memory_space<vmem>>, %arg5: memref<1x32xf32, #tpu.memory_space<vmem>>, %arg6: memref<32x32xf32, #tpu.memory_space<vmem>>, %arg7: memref<32x4xf32, #tpu.memory_space<vmem>>, %arg8: memref<4x32xf32, #tpu.memory_space<vmem>>, %arg9: memref<1x32xf32, #tpu.memory_space<vmem>>, %arg10: memref<32x16xf32, #tpu.memory_space<vmem>>, %arg11: memref<32x4xf32, #tpu.memory_space<vmem>>, %arg12: memref<4x16xf32, #tpu.memory_space<vmem>>, %arg13: memref<1x16xf32, #tpu.memory_space<vmem>>, %arg14: memref<16x32xf32, #tpu.memory_space<vmem>>, %arg15: memref<16x4xf32, #tpu.memory_space<vmem>>, %arg16: memref<4x32xf32, #tpu.memory_space<vmem>>, %arg17: memref<1x32xf32, #tpu.memory_space<vmem>>, %arg18: memref<32x32xf32, #tpu.memory_space<vmem>>, %arg19: memref<32x4xf32, #tpu.memory_space<vmem>>, %arg20: memref<4x32xf32, #tpu.memory_space<vmem>>, %arg21: memref<1x32xf32, #tpu.memory_space<vmem>>, %arg22: memref<32x16xf32, #tpu.memory_space<vmem>>, %arg23: memref<32x4xf32, #tpu.memory_space<vmem>>, %arg24: memref<4x16xf32, #tpu.memory_space<vmem>>, %arg25: memref<1x16xf32, #tpu.memory_space<vmem>>, %arg26: memref<16x16xf32, #tpu.memory_space<vmem>>, %arg27: memref<1x1xf32, #tpu.memory_space<vmem>>) attributes {dimension_semantics = [], scalar_prefetch = 0 : i64, scratch_operands = 0 : i64, tpu.core_type = #tpu.core_type<tc>} {
    %c1 = arith.constant 1 : index
    %c1_0 = arith.constant 1 : index
    %0 = vector.load %arg0[%c1, %c1_0] : memref<18x18xf32, #tpu.memory_space<vmem>>, vector<16x16xf32>
    %c0 = arith.constant 0 : index
    %c0_1 = arith.constant 0 : index
    %1 = vector.load %arg2[%c0, %c0_1] : memref<16x32xf32, #tpu.memory_space<vmem>>, vector<16x32xf32>
    %cst = arith.constant 0.000000e+00 : f32
    %2 = vector.broadcast %cst : f32 to vector<16x32xf32>
    %c0_2 = arith.constant 0 : index
    %c0_3 = arith.constant 0 : index
    %3 = vector.load %arg3[%c0_2, %c0_3] : memref<16x4xf32, #tpu.memory_space<vmem>>, vector<16x1xf32>
    %c0_4 = arith.constant 0 : index
    %c0_5 = arith.constant 0 : index
    %4 = vector.load %arg4[%c0_4, %c0_5] : memref<4x32xf32, #tpu.memory_space<vmem>>, vector<1x32xf32>
    %5 = vector.broadcast %3 : vector<16x1xf32> to vector<16x32xf32>
    %6 = vector.broadcast %4 : vector<1x32xf32> to vector<16x32xf32>
    %7 = arith.subf %5, %6 : vector<16x32xf32>
    %8 = arith.mulf %7, %7 : vector<16x32xf32>
    %9 = arith.addf %2, %8 : vector<16x32xf32>
    %c0_6 = arith.constant 0 : index
    %c1_7 = arith.constant 1 : index
    %10 = vector.load %arg3[%c0_6, %c1_7] : memref<16x4xf32, #tpu.memory_space<vmem>>, vector<16x1xf32>
    %c1_8 = arith.constant 1 : index
    %c0_9 = arith.constant 0 : index
    %11 = vector.load %arg4[%c1_8, %c0_9] : memref<4x32xf32, #tpu.memory_space<vmem>>, vector<1x32xf32>
    %12 = vector.broadcast %10 : vector<16x1xf32> to vector<16x32xf32>
    %13 = vector.broadcast %11 : vector<1x32xf32> to vector<16x32xf32>
    %14 = arith.subf %12, %13 : vector<16x32xf32>
    %15 = arith.mulf %14, %14 : vector<16x32xf32>
    %16 = arith.addf %9, %15 : vector<16x32xf32>
    %c0_10 = arith.constant 0 : index
    %c2 = arith.constant 2 : index
    %17 = vector.load %arg3[%c0_10, %c2] : memref<16x4xf32, #tpu.memory_space<vmem>>, vector<16x1xf32>
    %c2_11 = arith.constant 2 : index
    %c0_12 = arith.constant 0 : index
    %18 = vector.load %arg4[%c2_11, %c0_12] : memref<4x32xf32, #tpu.memory_space<vmem>>, vector<1x32xf32>
    %19 = vector.broadcast %17 : vector<16x1xf32> to vector<16x32xf32>
    %20 = vector.broadcast %18 : vector<1x32xf32> to vector<16x32xf32>
    %21 = arith.subf %19, %20 : vector<16x32xf32>
    %22 = arith.mulf %21, %21 : vector<16x32xf32>
    %23 = arith.addf %16, %22 : vector<16x32xf32>
    %c0_13 = arith.constant 0 : index
    %c3 = arith.constant 3 : index
    %24 = vector.load %arg3[%c0_13, %c3] : memref<16x4xf32, #tpu.memory_space<vmem>>, vector<16x1xf32>
    %c3_14 = arith.constant 3 : index
    %c0_15 = arith.constant 0 : index
    %25 = vector.load %arg4[%c3_14, %c0_15] : memref<4x32xf32, #tpu.memory_space<vmem>>, vector<1x32xf32>
    %26 = vector.broadcast %24 : vector<16x1xf32> to vector<16x32xf32>
    %27 = vector.broadcast %25 : vector<1x32xf32> to vector<16x32xf32>
    %28 = arith.subf %26, %27 : vector<16x32xf32>
    %29 = arith.mulf %28, %28 : vector<16x32xf32>
    %30 = arith.addf %23, %29 : vector<16x32xf32>
    %cst_16 = arith.constant 1.000000e+00 : f32
    %31 = vector.broadcast %cst_16 : f32 to vector<16x32xf32>
    %32 = arith.subf %31, %30 : vector<16x32xf32>
    %cst_17 = arith.constant 0.000000e+00 : f32
    %33 = vector.broadcast %cst_17 : f32 to vector<16x32xf32>
    %34 = arith.maximumf %32, %33 : vector<16x32xf32>
    %35 = arith.mulf %1, %34 : vector<16x32xf32>
    %36 = arith.truncf %0 : vector<16x16xf32> to vector<16x16xbf16>
    %37 = arith.truncf %35 : vector<16x32xf32> to vector<16x32xbf16>
    %cst_18 = arith.constant dense<0.000000e+00> : vector<16x32xf32>
    %38 = tpu.matmul %36, %37, %cst_18 {dimension_numbers = #tpu.dot_dimension_numbers<[1], [0], [0], [1], [0, 0, 1, 1], [], []>} : vector<16x16xbf16>, vector<16x32xbf16>, vector<16x32xf32> -> vector<16x32xf32>
    %c0_19 = arith.constant 0 : index
    %c0_20 = arith.constant 0 : index
    %39 = vector.load %arg5[%c0_19, %c0_20] : memref<1x32xf32, #tpu.memory_space<vmem>>, vector<1x32xf32>
    %40 = vector.broadcast %39 : vector<1x32xf32> to vector<16x32xf32>
    %41 = arith.addf %38, %40 : vector<16x32xf32>
    %42 = arith.negf %41 : vector<16x32xf32>
    %43 = math.exp %42 : vector<16x32xf32>
    %cst_21 = arith.constant 1.000000e+00 : f32
    %44 = vector.broadcast %cst_21 : f32 to vector<16x32xf32>
    %45 = arith.addf %44, %43 : vector<16x32xf32>
    %46 = arith.divf %44, %45 : vector<16x32xf32>
    %c0_22 = arith.constant 0 : index
    %c0_23 = arith.constant 0 : index
    %47 = vector.load %arg6[%c0_22, %c0_23] : memref<32x32xf32, #tpu.memory_space<vmem>>, vector<32x32xf32>
    %cst_24 = arith.constant 0.000000e+00 : f32
    %48 = vector.broadcast %cst_24 : f32 to vector<32x32xf32>
    %c0_25 = arith.constant 0 : index
    %c0_26 = arith.constant 0 : index
    %49 = vector.load %arg7[%c0_25, %c0_26] : memref<32x4xf32, #tpu.memory_space<vmem>>, vector<32x1xf32>
    %c0_27 = arith.constant 0 : index
    %c0_28 = arith.constant 0 : index
    %50 = vector.load %arg8[%c0_27, %c0_28] : memref<4x32xf32, #tpu.memory_space<vmem>>, vector<1x32xf32>
    %51 = vector.broadcast %49 : vector<32x1xf32> to vector<32x32xf32>
    %52 = vector.broadcast %50 : vector<1x32xf32> to vector<32x32xf32>
    %53 = arith.subf %51, %52 : vector<32x32xf32>
    %54 = arith.mulf %53, %53 : vector<32x32xf32>
    %55 = arith.addf %48, %54 : vector<32x32xf32>
    %c0_29 = arith.constant 0 : index
    %c1_30 = arith.constant 1 : index
    %56 = vector.load %arg7[%c0_29, %c1_30] : memref<32x4xf32, #tpu.memory_space<vmem>>, vector<32x1xf32>
    %c1_31 = arith.constant 1 : index
    %c0_32 = arith.constant 0 : index
    %57 = vector.load %arg8[%c1_31, %c0_32] : memref<4x32xf32, #tpu.memory_space<vmem>>, vector<1x32xf32>
    %58 = vector.broadcast %56 : vector<32x1xf32> to vector<32x32xf32>
    %59 = vector.broadcast %57 : vector<1x32xf32> to vector<32x32xf32>
    %60 = arith.subf %58, %59 : vector<32x32xf32>
    %61 = arith.mulf %60, %60 : vector<32x32xf32>
    %62 = arith.addf %55, %61 : vector<32x32xf32>
    %c0_33 = arith.constant 0 : index
    %c2_34 = arith.constant 2 : index
    %63 = vector.load %arg7[%c0_33, %c2_34] : memref<32x4xf32, #tpu.memory_space<vmem>>, vector<32x1xf32>
    %c2_35 = arith.constant 2 : index
    %c0_36 = arith.constant 0 : index
    %64 = vector.load %arg8[%c2_35, %c0_36] : memref<4x32xf32, #tpu.memory_space<vmem>>, vector<1x32xf32>
    %65 = vector.broadcast %63 : vector<32x1xf32> to vector<32x32xf32>
    %66 = vector.broadcast %64 : vector<1x32xf32> to vector<32x32xf32>
    %67 = arith.subf %65, %66 : vector<32x32xf32>
    %68 = arith.mulf %67, %67 : vector<32x32xf32>
    %69 = arith.addf %62, %68 : vector<32x32xf32>
    %c0_37 = arith.constant 0 : index
    %c3_38 = arith.constant 3 : index
    %70 = vector.load %arg7[%c0_37, %c3_38] : memref<32x4xf32, #tpu.memory_space<vmem>>, vector<32x1xf32>
    %c3_39 = arith.constant 3 : index
    %c0_40 = arith.constant 0 : index
    %71 = vector.load %arg8[%c3_39, %c0_40] : memref<4x32xf32, #tpu.memory_space<vmem>>, vector<1x32xf32>
    %72 = vector.broadcast %70 : vector<32x1xf32> to vector<32x32xf32>
    %73 = vector.broadcast %71 : vector<1x32xf32> to vector<32x32xf32>
    %74 = arith.subf %72, %73 : vector<32x32xf32>
    %75 = arith.mulf %74, %74 : vector<32x32xf32>
    %76 = arith.addf %69, %75 : vector<32x32xf32>
    %cst_41 = arith.constant 1.000000e+00 : f32
    %77 = vector.broadcast %cst_41 : f32 to vector<32x32xf32>
    %78 = arith.subf %77, %76 : vector<32x32xf32>
    %cst_42 = arith.constant 0.000000e+00 : f32
    %79 = vector.broadcast %cst_42 : f32 to vector<32x32xf32>
    %80 = arith.maximumf %78, %79 : vector<32x32xf32>
    %81 = arith.mulf %47, %80 : vector<32x32xf32>
    %82 = arith.truncf %46 : vector<16x32xf32> to vector<16x32xbf16>
    %83 = arith.truncf %81 : vector<32x32xf32> to vector<32x32xbf16>
    %cst_43 = arith.constant dense<0.000000e+00> : vector<16x32xf32>
    %84 = tpu.matmul %82, %83, %cst_43 {dimension_numbers = #tpu.dot_dimension_numbers<[1], [0], [0], [1], [0, 0, 1, 1], [], []>} : vector<16x32xbf16>, vector<32x32xbf16>, vector<16x32xf32> -> vector<16x32xf32>
    %c0_44 = arith.constant 0 : index
    %c0_45 = arith.constant 0 : index
    %85 = vector.load %arg9[%c0_44, %c0_45] : memref<1x32xf32, #tpu.memory_space<vmem>>, vector<1x32xf32>
    %86 = vector.broadcast %85 : vector<1x32xf32> to vector<16x32xf32>
    %87 = arith.addf %84, %86 : vector<16x32xf32>
    %88 = arith.negf %87 : vector<16x32xf32>
    %89 = math.exp %88 : vector<16x32xf32>
    %cst_46 = arith.constant 1.000000e+00 : f32
    %90 = vector.broadcast %cst_46 : f32 to vector<16x32xf32>
    %91 = arith.addf %90, %89 : vector<16x32xf32>
    %92 = arith.divf %90, %91 : vector<16x32xf32>
    %c0_47 = arith.constant 0 : index
    %c0_48 = arith.constant 0 : index
    %93 = vector.load %arg10[%c0_47, %c0_48] : memref<32x16xf32, #tpu.memory_space<vmem>>, vector<32x16xf32>
    %cst_49 = arith.constant 0.000000e+00 : f32
    %94 = vector.broadcast %cst_49 : f32 to vector<32x16xf32>
    %c0_50 = arith.constant 0 : index
    %c0_51 = arith.constant 0 : index
    %95 = vector.load %arg11[%c0_50, %c0_51] : memref<32x4xf32, #tpu.memory_space<vmem>>, vector<32x1xf32>
    %c0_52 = arith.constant 0 : index
    %c0_53 = arith.constant 0 : index
    %96 = vector.load %arg12[%c0_52, %c0_53] : memref<4x16xf32, #tpu.memory_space<vmem>>, vector<1x16xf32>
    %97 = vector.broadcast %95 : vector<32x1xf32> to vector<32x16xf32>
    %98 = vector.broadcast %96 : vector<1x16xf32> to vector<32x16xf32>
    %99 = arith.subf %97, %98 : vector<32x16xf32>
    %100 = arith.mulf %99, %99 : vector<32x16xf32>
    %101 = arith.addf %94, %100 : vector<32x16xf32>
    %c0_54 = arith.constant 0 : index
    %c1_55 = arith.constant 1 : index
    %102 = vector.load %arg11[%c0_54, %c1_55] : memref<32x4xf32, #tpu.memory_space<vmem>>, vector<32x1xf32>
    %c1_56 = arith.constant 1 : index
    %c0_57 = arith.constant 0 : index
    %103 = vector.load %arg12[%c1_56, %c0_57] : memref<4x16xf32, #tpu.memory_space<vmem>>, vector<1x16xf32>
    %104 = vector.broadcast %102 : vector<32x1xf32> to vector<32x16xf32>
    %105 = vector.broadcast %103 : vector<1x16xf32> to vector<32x16xf32>
    %106 = arith.subf %104, %105 : vector<32x16xf32>
    %107 = arith.mulf %106, %106 : vector<32x16xf32>
    %108 = arith.addf %101, %107 : vector<32x16xf32>
    %c0_58 = arith.constant 0 : index
    %c2_59 = arith.constant 2 : index
    %109 = vector.load %arg11[%c0_58, %c2_59] : memref<32x4xf32, #tpu.memory_space<vmem>>, vector<32x1xf32>
    %c2_60 = arith.constant 2 : index
    %c0_61 = arith.constant 0 : index
    %110 = vector.load %arg12[%c2_60, %c0_61] : memref<4x16xf32, #tpu.memory_space<vmem>>, vector<1x16xf32>
    %111 = vector.broadcast %109 : vector<32x1xf32> to vector<32x16xf32>
    %112 = vector.broadcast %110 : vector<1x16xf32> to vector<32x16xf32>
    %113 = arith.subf %111, %112 : vector<32x16xf32>
    %114 = arith.mulf %113, %113 : vector<32x16xf32>
    %115 = arith.addf %108, %114 : vector<32x16xf32>
    %c0_62 = arith.constant 0 : index
    %c3_63 = arith.constant 3 : index
    %116 = vector.load %arg11[%c0_62, %c3_63] : memref<32x4xf32, #tpu.memory_space<vmem>>, vector<32x1xf32>
    %c3_64 = arith.constant 3 : index
    %c0_65 = arith.constant 0 : index
    %117 = vector.load %arg12[%c3_64, %c0_65] : memref<4x16xf32, #tpu.memory_space<vmem>>, vector<1x16xf32>
    %118 = vector.broadcast %116 : vector<32x1xf32> to vector<32x16xf32>
    %119 = vector.broadcast %117 : vector<1x16xf32> to vector<32x16xf32>
    %120 = arith.subf %118, %119 : vector<32x16xf32>
    %121 = arith.mulf %120, %120 : vector<32x16xf32>
    %122 = arith.addf %115, %121 : vector<32x16xf32>
    %cst_66 = arith.constant 1.000000e+00 : f32
    %123 = vector.broadcast %cst_66 : f32 to vector<32x16xf32>
    %124 = arith.subf %123, %122 : vector<32x16xf32>
    %cst_67 = arith.constant 0.000000e+00 : f32
    %125 = vector.broadcast %cst_67 : f32 to vector<32x16xf32>
    %126 = arith.maximumf %124, %125 : vector<32x16xf32>
    %127 = arith.mulf %93, %126 : vector<32x16xf32>
    %128 = arith.truncf %92 : vector<16x32xf32> to vector<16x32xbf16>
    %129 = arith.truncf %127 : vector<32x16xf32> to vector<32x16xbf16>
    %cst_68 = arith.constant dense<0.000000e+00> : vector<16x16xf32>
    %130 = tpu.matmul %128, %129, %cst_68 {dimension_numbers = #tpu.dot_dimension_numbers<[1], [0], [0], [1], [0, 0, 1, 1], [], []>} : vector<16x32xbf16>, vector<32x16xbf16>, vector<16x16xf32> -> vector<16x16xf32>
    %c0_69 = arith.constant 0 : index
    %c0_70 = arith.constant 0 : index
    %131 = vector.load %arg13[%c0_69, %c0_70] : memref<1x16xf32, #tpu.memory_space<vmem>>, vector<1x16xf32>
    %132 = vector.broadcast %131 : vector<1x16xf32> to vector<16x16xf32>
    %133 = arith.addf %130, %132 : vector<16x16xf32>
    %cst_71 = arith.constant dense<0.000000e+00> : vector<16xf32>
    %134 = vector.multi_reduction <add>, %133, %cst_71 [0] : vector<16x16xf32> to vector<16xf32>
    %135 = vector.shape_cast %134 : vector<16xf32> to vector<1x16xf32>
    %cst_72 = arith.constant 6.250000e-02 : f32
    %136 = vector.broadcast %cst_72 : f32 to vector<1x16xf32>
    %137 = arith.mulf %135, %136 : vector<1x16xf32>
    %138 = arith.truncf %137 : vector<1x16xf32> to vector<1x16xbf16>
    %c0_73 = arith.constant 0 : index
    %c0_74 = arith.constant 0 : index
    %139 = vector.load %arg1[%c0_73, %c0_74] : memref<16x9xf32, #tpu.memory_space<vmem>>, vector<16x9xf32>
    %140 = arith.truncf %139 : vector<16x9xf32> to vector<16x9xbf16>
    %cst_75 = arith.constant dense<0.000000e+00> : vector<1x9xf32>
    %141 = tpu.matmul %138, %140, %cst_75 {dimension_numbers = #tpu.dot_dimension_numbers<[1], [0], [0], [1], [0, 0, 1, 1], [], []>} : vector<1x16xbf16>, vector<16x9xbf16>, vector<1x9xf32> -> vector<1x9xf32>
    %cst_76 = arith.constant 1.000000e+00 : f32
    %142 = vector.broadcast %cst_76 : f32 to vector<1x9xf32>
    %143 = arith.mulf %141, %142 : vector<1x9xf32>
    %cst_77 = arith.constant 0.000000e+00 : f32
    %144 = vector.broadcast %cst_77 : f32 to vector<16x16xf32>
    %145 = vector.extract_strided_slice %143 {offsets = [0, 0], sizes = [1, 1], strides = [1, 1]} : vector<1x9xf32> to vector<1x1xf32>
    %c0_78 = arith.constant 0 : index
    %c0_79 = arith.constant 0 : index
    %146 = vector.load %arg0[%c0_78, %c0_79] : memref<18x18xf32, #tpu.memory_space<vmem>>, vector<16x16xf32>
    %147 = vector.broadcast %145 : vector<1x1xf32> to vector<16x16xf32>
    %148 = arith.mulf %147, %146 : vector<16x16xf32>
    %149 = arith.addf %144, %148 : vector<16x16xf32>
    %150 = vector.extract_strided_slice %143 {offsets = [0, 1], sizes = [1, 1], strides = [1, 1]} : vector<1x9xf32> to vector<1x1xf32>
    %c0_80 = arith.constant 0 : index
    %c1_81 = arith.constant 1 : index
    %151 = vector.load %arg0[%c0_80, %c1_81] : memref<18x18xf32, #tpu.memory_space<vmem>>, vector<16x16xf32>
    %152 = vector.broadcast %150 : vector<1x1xf32> to vector<16x16xf32>
    %153 = arith.mulf %152, %151 : vector<16x16xf32>
    %154 = arith.addf %149, %153 : vector<16x16xf32>
    %155 = vector.extract_strided_slice %143 {offsets = [0, 2], sizes = [1, 1], strides = [1, 1]} : vector<1x9xf32> to vector<1x1xf32>
    %c0_82 = arith.constant 0 : index
    %c2_83 = arith.constant 2 : index
    %156 = vector.load %arg0[%c0_82, %c2_83] : memref<18x18xf32, #tpu.memory_space<vmem>>, vector<16x16xf32>
    %157 = vector.broadcast %155 : vector<1x1xf32> to vector<16x16xf32>
    %158 = arith.mulf %157, %156 : vector<16x16xf32>
    %159 = arith.addf %154, %158 : vector<16x16xf32>
    %160 = vector.extract_strided_slice %143 {offsets = [0, 3], sizes = [1, 1], strides = [1, 1]} : vector<1x9xf32> to vector<1x1xf32>
    %c1_84 = arith.constant 1 : index
    %c0_85 = arith.constant 0 : index
    %161 = vector.load %arg0[%c1_84, %c0_85] : memref<18x18xf32, #tpu.memory_space<vmem>>, vector<16x16xf32>
    %162 = vector.broadcast %160 : vector<1x1xf32> to vector<16x16xf32>
    %163 = arith.mulf %162, %161 : vector<16x16xf32>
    %164 = arith.addf %159, %163 : vector<16x16xf32>
    %165 = vector.extract_strided_slice %143 {offsets = [0, 4], sizes = [1, 1], strides = [1, 1]} : vector<1x9xf32> to vector<1x1xf32>
    %c1_86 = arith.constant 1 : index
    %c1_87 = arith.constant 1 : index
    %166 = vector.load %arg0[%c1_86, %c1_87] : memref<18x18xf32, #tpu.memory_space<vmem>>, vector<16x16xf32>
    %167 = vector.broadcast %165 : vector<1x1xf32> to vector<16x16xf32>
    %168 = arith.mulf %167, %166 : vector<16x16xf32>
    %169 = arith.addf %164, %168 : vector<16x16xf32>
    %170 = vector.extract_strided_slice %143 {offsets = [0, 5], sizes = [1, 1], strides = [1, 1]} : vector<1x9xf32> to vector<1x1xf32>
    %c1_88 = arith.constant 1 : index
    %c2_89 = arith.constant 2 : index
    %171 = vector.load %arg0[%c1_88, %c2_89] : memref<18x18xf32, #tpu.memory_space<vmem>>, vector<16x16xf32>
    %172 = vector.broadcast %170 : vector<1x1xf32> to vector<16x16xf32>
    %173 = arith.mulf %172, %171 : vector<16x16xf32>
    %174 = arith.addf %169, %173 : vector<16x16xf32>
    %175 = vector.extract_strided_slice %143 {offsets = [0, 6], sizes = [1, 1], strides = [1, 1]} : vector<1x9xf32> to vector<1x1xf32>
    %c2_90 = arith.constant 2 : index
    %c0_91 = arith.constant 0 : index
    %176 = vector.load %arg0[%c2_90, %c0_91] : memref<18x18xf32, #tpu.memory_space<vmem>>, vector<16x16xf32>
    %177 = vector.broadcast %175 : vector<1x1xf32> to vector<16x16xf32>
    %178 = arith.mulf %177, %176 : vector<16x16xf32>
    %179 = arith.addf %174, %178 : vector<16x16xf32>
    %180 = vector.extract_strided_slice %143 {offsets = [0, 7], sizes = [1, 1], strides = [1, 1]} : vector<1x9xf32> to vector<1x1xf32>
    %c2_92 = arith.constant 2 : index
    %c1_93 = arith.constant 1 : index
    %181 = vector.load %arg0[%c2_92, %c1_93] : memref<18x18xf32, #tpu.memory_space<vmem>>, vector<16x16xf32>
    %182 = vector.broadcast %180 : vector<1x1xf32> to vector<16x16xf32>
    %183 = arith.mulf %182, %181 : vector<16x16xf32>
    %184 = arith.addf %179, %183 : vector<16x16xf32>
    %185 = vector.extract_strided_slice %143 {offsets = [0, 8], sizes = [1, 1], strides = [1, 1]} : vector<1x9xf32> to vector<1x1xf32>
    %c2_94 = arith.constant 2 : index
    %c2_95 = arith.constant 2 : index
    %186 = vector.load %arg0[%c2_94, %c2_95] : memref<18x18xf32, #tpu.memory_space<vmem>>, vector<16x16xf32>
    %187 = vector.broadcast %185 : vector<1x1xf32> to vector<16x16xf32>
    %188 = arith.mulf %187, %186 : vector<16x16xf32>
    %189 = arith.addf %184, %188 : vector<16x16xf32>
    %cst_96 = arith.constant 0.000000e+00 : f32
    %190 = vector.broadcast %cst_96 : f32 to vector<16x16xf32>
    %191 = arith.cmpf ogt, %189, %190 : vector<16x16xf32>
    %cst_97 = arith.constant 0.00999999977 : f32
    %192 = vector.broadcast %cst_97 : f32 to vector<16x16xf32>
    %193 = arith.mulf %192, %189 : vector<16x16xf32>
    %194 = arith.select %191, %189, %193 : vector<16x16xi1>, vector<16x16xf32>
    %cst_98 = arith.constant 0.000000e+00 : f32
    %195 = vector.broadcast %cst_98 : f32 to vector<1x1xf32>
    %c0_99 = arith.constant 0 : index
    %c0_100 = arith.constant 0 : index
    %196 = vector.load %arg14[%c0_99, %c0_100] : memref<16x32xf32, #tpu.memory_space<vmem>>, vector<16x32xf32>
    %cst_101 = arith.constant 0.000000e+00 : f32
    %197 = vector.broadcast %cst_101 : f32 to vector<16x32xf32>
    %c0_102 = arith.constant 0 : index
    %c0_103 = arith.constant 0 : index
    %198 = vector.load %arg15[%c0_102, %c0_103] : memref<16x4xf32, #tpu.memory_space<vmem>>, vector<16x1xf32>
    %c0_104 = arith.constant 0 : index
    %c0_105 = arith.constant 0 : index
    %199 = vector.load %arg16[%c0_104, %c0_105] : memref<4x32xf32, #tpu.memory_space<vmem>>, vector<1x32xf32>
    %200 = vector.broadcast %198 : vector<16x1xf32> to vector<16x32xf32>
    %201 = vector.broadcast %199 : vector<1x32xf32> to vector<16x32xf32>
    %202 = arith.subf %200, %201 : vector<16x32xf32>
    %203 = arith.mulf %202, %202 : vector<16x32xf32>
    %204 = arith.addf %197, %203 : vector<16x32xf32>
    %c0_106 = arith.constant 0 : index
    %c1_107 = arith.constant 1 : index
    %205 = vector.load %arg15[%c0_106, %c1_107] : memref<16x4xf32, #tpu.memory_space<vmem>>, vector<16x1xf32>
    %c1_108 = arith.constant 1 : index
    %c0_109 = arith.constant 0 : index
    %206 = vector.load %arg16[%c1_108, %c0_109] : memref<4x32xf32, #tpu.memory_space<vmem>>, vector<1x32xf32>
    %207 = vector.broadcast %205 : vector<16x1xf32> to vector<16x32xf32>
    %208 = vector.broadcast %206 : vector<1x32xf32> to vector<16x32xf32>
    %209 = arith.subf %207, %208 : vector<16x32xf32>
    %210 = arith.mulf %209, %209 : vector<16x32xf32>
    %211 = arith.addf %204, %210 : vector<16x32xf32>
    %c0_110 = arith.constant 0 : index
    %c2_111 = arith.constant 2 : index
    %212 = vector.load %arg15[%c0_110, %c2_111] : memref<16x4xf32, #tpu.memory_space<vmem>>, vector<16x1xf32>
    %c2_112 = arith.constant 2 : index
    %c0_113 = arith.constant 0 : index
    %213 = vector.load %arg16[%c2_112, %c0_113] : memref<4x32xf32, #tpu.memory_space<vmem>>, vector<1x32xf32>
    %214 = vector.broadcast %212 : vector<16x1xf32> to vector<16x32xf32>
    %215 = vector.broadcast %213 : vector<1x32xf32> to vector<16x32xf32>
    %216 = arith.subf %214, %215 : vector<16x32xf32>
    %217 = arith.mulf %216, %216 : vector<16x32xf32>
    %218 = arith.addf %211, %217 : vector<16x32xf32>
    %c0_114 = arith.constant 0 : index
    %c3_115 = arith.constant 3 : index
    %219 = vector.load %arg15[%c0_114, %c3_115] : memref<16x4xf32, #tpu.memory_space<vmem>>, vector<16x1xf32>
    %c3_116 = arith.constant 3 : index
    %c0_117 = arith.constant 0 : index
    %220 = vector.load %arg16[%c3_116, %c0_117] : memref<4x32xf32, #tpu.memory_space<vmem>>, vector<1x32xf32>
    %221 = vector.broadcast %219 : vector<16x1xf32> to vector<16x32xf32>
    %222 = vector.broadcast %220 : vector<1x32xf32> to vector<16x32xf32>
    %223 = arith.subf %221, %222 : vector<16x32xf32>
    %224 = arith.mulf %223, %223 : vector<16x32xf32>
    %225 = arith.addf %218, %224 : vector<16x32xf32>
    %cst_118 = arith.constant 1.000000e+00 : f32
    %226 = vector.broadcast %cst_118 : f32 to vector<16x32xf32>
    %227 = arith.subf %226, %225 : vector<16x32xf32>
    %cst_119 = arith.constant 0.000000e+00 : f32
    %228 = vector.broadcast %cst_119 : f32 to vector<16x32xf32>
    %229 = arith.maximumf %227, %228 : vector<16x32xf32>
    %230 = arith.mulf %196, %229 : vector<16x32xf32>
    %231 = arith.truncf %194 : vector<16x16xf32> to vector<16x16xbf16>
    %232 = arith.truncf %230 : vector<16x32xf32> to vector<16x32xbf16>
    %cst_120 = arith.constant dense<0.000000e+00> : vector<16x32xf32>
    %233 = tpu.matmul %231, %232, %cst_120 {dimension_numbers = #tpu.dot_dimension_numbers<[1], [0], [0], [1], [0, 0, 1, 1], [], []>} : vector<16x16xbf16>, vector<16x32xbf16>, vector<16x32xf32> -> vector<16x32xf32>
    %c0_121 = arith.constant 0 : index
    %c0_122 = arith.constant 0 : index
    %234 = vector.load %arg17[%c0_121, %c0_122] : memref<1x32xf32, #tpu.memory_space<vmem>>, vector<1x32xf32>
    %235 = vector.broadcast %234 : vector<1x32xf32> to vector<16x32xf32>
    %236 = arith.addf %233, %235 : vector<16x32xf32>
    %237 = arith.negf %236 : vector<16x32xf32>
    %238 = math.exp %237 : vector<16x32xf32>
    %cst_123 = arith.constant 1.000000e+00 : f32
    %239 = vector.broadcast %cst_123 : f32 to vector<16x32xf32>
    %240 = arith.addf %239, %238 : vector<16x32xf32>
    %241 = arith.divf %239, %240 : vector<16x32xf32>
    %242 = arith.mulf %229, %229 : vector<16x32xf32>
    %cst_124 = arith.constant dense<0.000000e+00> : vector<32xf32>
    %243 = vector.multi_reduction <add>, %242, %cst_124 [0] : vector<16x32xf32> to vector<32xf32>
    %244 = vector.shape_cast %243 : vector<32xf32> to vector<1x32xf32>
    %cst_125 = arith.constant dense<0.000000e+00> : vector<1xf32>
    %245 = vector.multi_reduction <add>, %244, %cst_125 [1] : vector<1x32xf32> to vector<1xf32>
    %246 = vector.shape_cast %245 : vector<1xf32> to vector<1x1xf32>
    %cst_126 = arith.constant 0.001953125 : f32
    %247 = vector.broadcast %cst_126 : f32 to vector<1x1xf32>
    %248 = arith.mulf %246, %247 : vector<1x1xf32>
    %249 = arith.mulf %196, %196 : vector<16x32xf32>
    %cst_127 = arith.constant dense<0.000000e+00> : vector<32xf32>
    %250 = vector.multi_reduction <add>, %249, %cst_127 [0] : vector<16x32xf32> to vector<32xf32>
    %251 = vector.shape_cast %250 : vector<32xf32> to vector<1x32xf32>
    %cst_128 = arith.constant dense<0.000000e+00> : vector<1xf32>
    %252 = vector.multi_reduction <add>, %251, %cst_128 [1] : vector<1x32xf32> to vector<1xf32>
    %253 = vector.shape_cast %252 : vector<1xf32> to vector<1x1xf32>
    %cst_129 = arith.constant 0.001953125 : f32
    %254 = vector.broadcast %cst_129 : f32 to vector<1x1xf32>
    %255 = arith.mulf %253, %254 : vector<1x1xf32>
    %cst_130 = arith.constant 6.000000e-03 : f32
    %256 = vector.broadcast %cst_130 : f32 to vector<1x1xf32>
    %257 = arith.mulf %256, %248 : vector<1x1xf32>
    %cst_131 = arith.constant 2.000000e+01 : f32
    %258 = vector.broadcast %cst_131 : f32 to vector<1x1xf32>
    %259 = arith.mulf %258, %255 : vector<1x1xf32>
    %260 = arith.addf %257, %259 : vector<1x1xf32>
    %261 = arith.addf %195, %260 : vector<1x1xf32>
    %c0_132 = arith.constant 0 : index
    %c0_133 = arith.constant 0 : index
    %262 = vector.load %arg18[%c0_132, %c0_133] : memref<32x32xf32, #tpu.memory_space<vmem>>, vector<32x32xf32>
    %cst_134 = arith.constant 0.000000e+00 : f32
    %263 = vector.broadcast %cst_134 : f32 to vector<32x32xf32>
    %c0_135 = arith.constant 0 : index
    %c0_136 = arith.constant 0 : index
    %264 = vector.load %arg19[%c0_135, %c0_136] : memref<32x4xf32, #tpu.memory_space<vmem>>, vector<32x1xf32>
    %c0_137 = arith.constant 0 : index
    %c0_138 = arith.constant 0 : index
    %265 = vector.load %arg20[%c0_137, %c0_138] : memref<4x32xf32, #tpu.memory_space<vmem>>, vector<1x32xf32>
    %266 = vector.broadcast %264 : vector<32x1xf32> to vector<32x32xf32>
    %267 = vector.broadcast %265 : vector<1x32xf32> to vector<32x32xf32>
    %268 = arith.subf %266, %267 : vector<32x32xf32>
    %269 = arith.mulf %268, %268 : vector<32x32xf32>
    %270 = arith.addf %263, %269 : vector<32x32xf32>
    %c0_139 = arith.constant 0 : index
    %c1_140 = arith.constant 1 : index
    %271 = vector.load %arg19[%c0_139, %c1_140] : memref<32x4xf32, #tpu.memory_space<vmem>>, vector<32x1xf32>
    %c1_141 = arith.constant 1 : index
    %c0_142 = arith.constant 0 : index
    %272 = vector.load %arg20[%c1_141, %c0_142] : memref<4x32xf32, #tpu.memory_space<vmem>>, vector<1x32xf32>
    %273 = vector.broadcast %271 : vector<32x1xf32> to vector<32x32xf32>
    %274 = vector.broadcast %272 : vector<1x32xf32> to vector<32x32xf32>
    %275 = arith.subf %273, %274 : vector<32x32xf32>
    %276 = arith.mulf %275, %275 : vector<32x32xf32>
    %277 = arith.addf %270, %276 : vector<32x32xf32>
    %c0_143 = arith.constant 0 : index
    %c2_144 = arith.constant 2 : index
    %278 = vector.load %arg19[%c0_143, %c2_144] : memref<32x4xf32, #tpu.memory_space<vmem>>, vector<32x1xf32>
    %c2_145 = arith.constant 2 : index
    %c0_146 = arith.constant 0 : index
    %279 = vector.load %arg20[%c2_145, %c0_146] : memref<4x32xf32, #tpu.memory_space<vmem>>, vector<1x32xf32>
    %280 = vector.broadcast %278 : vector<32x1xf32> to vector<32x32xf32>
    %281 = vector.broadcast %279 : vector<1x32xf32> to vector<32x32xf32>
    %282 = arith.subf %280, %281 : vector<32x32xf32>
    %283 = arith.mulf %282, %282 : vector<32x32xf32>
    %284 = arith.addf %277, %283 : vector<32x32xf32>
    %c0_147 = arith.constant 0 : index
    %c3_148 = arith.constant 3 : index
    %285 = vector.load %arg19[%c0_147, %c3_148] : memref<32x4xf32, #tpu.memory_space<vmem>>, vector<32x1xf32>
    %c3_149 = arith.constant 3 : index
    %c0_150 = arith.constant 0 : index
    %286 = vector.load %arg20[%c3_149, %c0_150] : memref<4x32xf32, #tpu.memory_space<vmem>>, vector<1x32xf32>
    %287 = vector.broadcast %285 : vector<32x1xf32> to vector<32x32xf32>
    %288 = vector.broadcast %286 : vector<1x32xf32> to vector<32x32xf32>
    %289 = arith.subf %287, %288 : vector<32x32xf32>
    %290 = arith.mulf %289, %289 : vector<32x32xf32>
    %291 = arith.addf %284, %290 : vector<32x32xf32>
    %cst_151 = arith.constant 1.000000e+00 : f32
    %292 = vector.broadcast %cst_151 : f32 to vector<32x32xf32>
    %293 = arith.subf %292, %291 : vector<32x32xf32>
    %cst_152 = arith.constant 0.000000e+00 : f32
    %294 = vector.broadcast %cst_152 : f32 to vector<32x32xf32>
    %295 = arith.maximumf %293, %294 : vector<32x32xf32>
    %296 = arith.mulf %262, %295 : vector<32x32xf32>
    %297 = arith.truncf %241 : vector<16x32xf32> to vector<16x32xbf16>
    %298 = arith.truncf %296 : vector<32x32xf32> to vector<32x32xbf16>
    %cst_153 = arith.constant dense<0.000000e+00> : vector<16x32xf32>
    %299 = tpu.matmul %297, %298, %cst_153 {dimension_numbers = #tpu.dot_dimension_numbers<[1], [0], [0], [1], [0, 0, 1, 1], [], []>} : vector<16x32xbf16>, vector<32x32xbf16>, vector<16x32xf32> -> vector<16x32xf32>
    %c0_154 = arith.constant 0 : index
    %c0_155 = arith.constant 0 : index
    %300 = vector.load %arg21[%c0_154, %c0_155] : memref<1x32xf32, #tpu.memory_space<vmem>>, vector<1x32xf32>
    %301 = vector.broadcast %300 : vector<1x32xf32> to vector<16x32xf32>
    %302 = arith.addf %299, %301 : vector<16x32xf32>
    %303 = arith.negf %302 : vector<16x32xf32>
    %304 = math.exp %303 : vector<16x32xf32>
    %cst_156 = arith.constant 1.000000e+00 : f32
    %305 = vector.broadcast %cst_156 : f32 to vector<16x32xf32>
    %306 = arith.addf %305, %304 : vector<16x32xf32>
    %307 = arith.divf %305, %306 : vector<16x32xf32>
    %308 = arith.mulf %295, %295 : vector<32x32xf32>
    %cst_157 = arith.constant dense<0.000000e+00> : vector<32xf32>
    %309 = vector.multi_reduction <add>, %308, %cst_157 [0] : vector<32x32xf32> to vector<32xf32>
    %310 = vector.shape_cast %309 : vector<32xf32> to vector<1x32xf32>
    %cst_158 = arith.constant dense<0.000000e+00> : vector<1xf32>
    %311 = vector.multi_reduction <add>, %310, %cst_158 [1] : vector<1x32xf32> to vector<1xf32>
    %312 = vector.shape_cast %311 : vector<1xf32> to vector<1x1xf32>
    %cst_159 = arith.constant 9.765625E-4 : f32
    %313 = vector.broadcast %cst_159 : f32 to vector<1x1xf32>
    %314 = arith.mulf %312, %313 : vector<1x1xf32>
    %315 = arith.mulf %262, %262 : vector<32x32xf32>
    %cst_160 = arith.constant dense<0.000000e+00> : vector<32xf32>
    %316 = vector.multi_reduction <add>, %315, %cst_160 [0] : vector<32x32xf32> to vector<32xf32>
    %317 = vector.shape_cast %316 : vector<32xf32> to vector<1x32xf32>
    %cst_161 = arith.constant dense<0.000000e+00> : vector<1xf32>
    %318 = vector.multi_reduction <add>, %317, %cst_161 [1] : vector<1x32xf32> to vector<1xf32>
    %319 = vector.shape_cast %318 : vector<1xf32> to vector<1x1xf32>
    %cst_162 = arith.constant 9.765625E-4 : f32
    %320 = vector.broadcast %cst_162 : f32 to vector<1x1xf32>
    %321 = arith.mulf %319, %320 : vector<1x1xf32>
    %cst_163 = arith.constant 6.000000e-03 : f32
    %322 = vector.broadcast %cst_163 : f32 to vector<1x1xf32>
    %323 = arith.mulf %322, %314 : vector<1x1xf32>
    %cst_164 = arith.constant 2.000000e+01 : f32
    %324 = vector.broadcast %cst_164 : f32 to vector<1x1xf32>
    %325 = arith.mulf %324, %321 : vector<1x1xf32>
    %326 = arith.addf %323, %325 : vector<1x1xf32>
    %327 = arith.addf %261, %326 : vector<1x1xf32>
    %c0_165 = arith.constant 0 : index
    %c0_166 = arith.constant 0 : index
    %328 = vector.load %arg22[%c0_165, %c0_166] : memref<32x16xf32, #tpu.memory_space<vmem>>, vector<32x16xf32>
    %cst_167 = arith.constant 0.000000e+00 : f32
    %329 = vector.broadcast %cst_167 : f32 to vector<32x16xf32>
    %c0_168 = arith.constant 0 : index
    %c0_169 = arith.constant 0 : index
    %330 = vector.load %arg23[%c0_168, %c0_169] : memref<32x4xf32, #tpu.memory_space<vmem>>, vector<32x1xf32>
    %c0_170 = arith.constant 0 : index
    %c0_171 = arith.constant 0 : index
    %331 = vector.load %arg24[%c0_170, %c0_171] : memref<4x16xf32, #tpu.memory_space<vmem>>, vector<1x16xf32>
    %332 = vector.broadcast %330 : vector<32x1xf32> to vector<32x16xf32>
    %333 = vector.broadcast %331 : vector<1x16xf32> to vector<32x16xf32>
    %334 = arith.subf %332, %333 : vector<32x16xf32>
    %335 = arith.mulf %334, %334 : vector<32x16xf32>
    %336 = arith.addf %329, %335 : vector<32x16xf32>
    %c0_172 = arith.constant 0 : index
    %c1_173 = arith.constant 1 : index
    %337 = vector.load %arg23[%c0_172, %c1_173] : memref<32x4xf32, #tpu.memory_space<vmem>>, vector<32x1xf32>
    %c1_174 = arith.constant 1 : index
    %c0_175 = arith.constant 0 : index
    %338 = vector.load %arg24[%c1_174, %c0_175] : memref<4x16xf32, #tpu.memory_space<vmem>>, vector<1x16xf32>
    %339 = vector.broadcast %337 : vector<32x1xf32> to vector<32x16xf32>
    %340 = vector.broadcast %338 : vector<1x16xf32> to vector<32x16xf32>
    %341 = arith.subf %339, %340 : vector<32x16xf32>
    %342 = arith.mulf %341, %341 : vector<32x16xf32>
    %343 = arith.addf %336, %342 : vector<32x16xf32>
    %c0_176 = arith.constant 0 : index
    %c2_177 = arith.constant 2 : index
    %344 = vector.load %arg23[%c0_176, %c2_177] : memref<32x4xf32, #tpu.memory_space<vmem>>, vector<32x1xf32>
    %c2_178 = arith.constant 2 : index
    %c0_179 = arith.constant 0 : index
    %345 = vector.load %arg24[%c2_178, %c0_179] : memref<4x16xf32, #tpu.memory_space<vmem>>, vector<1x16xf32>
    %346 = vector.broadcast %344 : vector<32x1xf32> to vector<32x16xf32>
    %347 = vector.broadcast %345 : vector<1x16xf32> to vector<32x16xf32>
    %348 = arith.subf %346, %347 : vector<32x16xf32>
    %349 = arith.mulf %348, %348 : vector<32x16xf32>
    %350 = arith.addf %343, %349 : vector<32x16xf32>
    %c0_180 = arith.constant 0 : index
    %c3_181 = arith.constant 3 : index
    %351 = vector.load %arg23[%c0_180, %c3_181] : memref<32x4xf32, #tpu.memory_space<vmem>>, vector<32x1xf32>
    %c3_182 = arith.constant 3 : index
    %c0_183 = arith.constant 0 : index
    %352 = vector.load %arg24[%c3_182, %c0_183] : memref<4x16xf32, #tpu.memory_space<vmem>>, vector<1x16xf32>
    %353 = vector.broadcast %351 : vector<32x1xf32> to vector<32x16xf32>
    %354 = vector.broadcast %352 : vector<1x16xf32> to vector<32x16xf32>
    %355 = arith.subf %353, %354 : vector<32x16xf32>
    %356 = arith.mulf %355, %355 : vector<32x16xf32>
    %357 = arith.addf %350, %356 : vector<32x16xf32>
    %cst_184 = arith.constant 1.000000e+00 : f32
    %358 = vector.broadcast %cst_184 : f32 to vector<32x16xf32>
    %359 = arith.subf %358, %357 : vector<32x16xf32>
    %cst_185 = arith.constant 0.000000e+00 : f32
    %360 = vector.broadcast %cst_185 : f32 to vector<32x16xf32>
    %361 = arith.maximumf %359, %360 : vector<32x16xf32>
    %362 = arith.mulf %328, %361 : vector<32x16xf32>
    %363 = arith.truncf %307 : vector<16x32xf32> to vector<16x32xbf16>
    %364 = arith.truncf %362 : vector<32x16xf32> to vector<32x16xbf16>
    %cst_186 = arith.constant dense<0.000000e+00> : vector<16x16xf32>
    %365 = tpu.matmul %363, %364, %cst_186 {dimension_numbers = #tpu.dot_dimension_numbers<[1], [0], [0], [1], [0, 0, 1, 1], [], []>} : vector<16x32xbf16>, vector<32x16xbf16>, vector<16x16xf32> -> vector<16x16xf32>
    %c0_187 = arith.constant 0 : index
    %c0_188 = arith.constant 0 : index
    %366 = vector.load %arg25[%c0_187, %c0_188] : memref<1x16xf32, #tpu.memory_space<vmem>>, vector<1x16xf32>
    %367 = vector.broadcast %366 : vector<1x16xf32> to vector<16x16xf32>
    %368 = arith.addf %365, %367 : vector<16x16xf32>
    %369 = arith.mulf %361, %361 : vector<32x16xf32>
    %cst_189 = arith.constant dense<0.000000e+00> : vector<16xf32>
    %370 = vector.multi_reduction <add>, %369, %cst_189 [0] : vector<32x16xf32> to vector<16xf32>
    %371 = vector.shape_cast %370 : vector<16xf32> to vector<1x16xf32>
    %cst_190 = arith.constant dense<0.000000e+00> : vector<1xf32>
    %372 = vector.multi_reduction <add>, %371, %cst_190 [1] : vector<1x16xf32> to vector<1xf32>
    %373 = vector.shape_cast %372 : vector<1xf32> to vector<1x1xf32>
    %cst_191 = arith.constant 0.001953125 : f32
    %374 = vector.broadcast %cst_191 : f32 to vector<1x1xf32>
    %375 = arith.mulf %373, %374 : vector<1x1xf32>
    %376 = arith.mulf %328, %328 : vector<32x16xf32>
    %cst_192 = arith.constant dense<0.000000e+00> : vector<16xf32>
    %377 = vector.multi_reduction <add>, %376, %cst_192 [0] : vector<32x16xf32> to vector<16xf32>
    %378 = vector.shape_cast %377 : vector<16xf32> to vector<1x16xf32>
    %cst_193 = arith.constant dense<0.000000e+00> : vector<1xf32>
    %379 = vector.multi_reduction <add>, %378, %cst_193 [1] : vector<1x16xf32> to vector<1xf32>
    %380 = vector.shape_cast %379 : vector<1xf32> to vector<1x1xf32>
    %cst_194 = arith.constant 0.001953125 : f32
    %381 = vector.broadcast %cst_194 : f32 to vector<1x1xf32>
    %382 = arith.mulf %380, %381 : vector<1x1xf32>
    %cst_195 = arith.constant 6.000000e-03 : f32
    %383 = vector.broadcast %cst_195 : f32 to vector<1x1xf32>
    %384 = arith.mulf %383, %375 : vector<1x1xf32>
    %cst_196 = arith.constant 2.000000e+01 : f32
    %385 = vector.broadcast %cst_196 : f32 to vector<1x1xf32>
    %386 = arith.mulf %385, %382 : vector<1x1xf32>
    %387 = arith.addf %384, %386 : vector<1x1xf32>
    %388 = arith.addf %327, %387 : vector<1x1xf32>
    %c0_197 = arith.constant 0 : index
    %c0_198 = arith.constant 0 : index
    %389 = vector.load %arg26[%c0_197, %c0_198] : memref<16x16xf32, #tpu.memory_space<vmem>>, vector<16x16xf32>
    tpu.vector_store %arg26[%c0_197, %c0_198], %368 {strides = array<i32>} : memref<16x16xf32, #tpu.memory_space<vmem>>, vector<16x16xf32>,
    %c0_199 = arith.constant 0 : index
    %c0_200 = arith.constant 0 : index
    %390 = vector.load %arg27[%c0_199, %c0_200] : memref<1x1xf32, #tpu.memory_space<vmem>>, vector<1x1xf32>
    tpu.vector_store %arg27[%c0_199, %c0_200], %388 {strides = array<i32>} : memref<1x1xf32, #tpu.memory_space<vmem>>, vector<1x1xf32>,
    return
  }
}

</mosaic_0001>

<llo_original>
// kernel: complete_net_forward.1
$region0: #{complete_net_forward.1}
  #allocation0 [shape = 'u32[]', space=smem, size = 0x4, offset = 0x4, fixed_abs, tag = 'smem constant byte address 0x4 - core index']
  #allocation1 [shape = 'u32[72,128]{1,0:T(1,128)}', space=vmem, size = 0x9000, scoped, tag = 'internal scratch']
  %s0 = inlined_call_operand.vmem [shape: f32[18,18], index: 0, kind: input, shape index: {}]
  %s1 = inlined_call_operand.vmem [shape: f32[16,9], index: 1, kind: input, shape index: {}]
  %s2 = inlined_call_operand.vmem [shape: f32[16,32], index: 2, kind: input, shape index: {}]
  %s3 = inlined_call_operand.vmem [shape: f32[16,4], index: 3, kind: input, shape index: {}]
  %s4 = inlined_call_operand.vmem [shape: f32[4,32], index: 4, kind: input, shape index: {}]
  %s5 = inlined_call_operand.vmem [shape: f32[1,32], index: 5, kind: input, shape index: {}]
  %s6 = inlined_call_operand.vmem [shape: f32[32,32], index: 6, kind: input, shape index: {}]
  %s7 = inlined_call_operand.vmem [shape: f32[32,4], index: 7, kind: input, shape index: {}]
  %s8 = inlined_call_operand.vmem [shape: f32[4,32], index: 8, kind: input, shape index: {}]
  %s9 = inlined_call_operand.vmem [shape: f32[1,32], index: 9, kind: input, shape index: {}]
  %s10 = inlined_call_operand.vmem [shape: f32[32,16], index: 10, kind: input, shape index: {}]
  %s11 = inlined_call_operand.vmem [shape: f32[32,4], index: 11, kind: input, shape index: {}]
  %s12 = inlined_call_operand.vmem [shape: f32[4,16], index: 12, kind: input, shape index: {}]
  %s13 = inlined_call_operand.vmem [shape: f32[1,16], index: 13, kind: input, shape index: {}]
  %s14 = inlined_call_operand.vmem [shape: f32[16,32], index: 14, kind: input, shape index: {}]
  %s15 = inlined_call_operand.vmem [shape: f32[16,4], index: 15, kind: input, shape index: {}]
  %s16 = inlined_call_operand.vmem [shape: f32[4,32], index: 16, kind: input, shape index: {}]
  %s17 = inlined_call_operand.vmem [shape: f32[1,32], index: 17, kind: input, shape index: {}]
  %s18 = inlined_call_operand.vmem [shape: f32[32,32], index: 18, kind: input, shape index: {}]
  %s19 = inlined_call_operand.vmem [shape: f32[32,4], index: 19, kind: input, shape index: {}]
  %s20 = inlined_call_operand.vmem [shape: f32[4,32], index: 20, kind: input, shape index: {}]
  %s21 = inlined_call_operand.vmem [shape: f32[1,32], index: 21, kind: input, shape index: {}]
  %s22 = inlined_call_operand.vmem [shape: f32[32,16], index: 22, kind: input, shape index: {}]
  %s23 = inlined_call_operand.vmem [shape: f32[32,4], index: 23, kind: input, shape index: {}]
  %s24 = inlined_call_operand.vmem [shape: f32[4,16], index: 24, kind: input, shape index: {}]
  %s25 = inlined_call_operand.vmem [shape: f32[1,16], index: 25, kind: input, shape index: {}]
  %s26 = inlined_call_operand.hbm [shape: f32[16,16], index: 26, kind: output, shape index: {0}]
  %s27 = inlined_call_operand.hbm [shape: f32[1,1], index: 27, kind: output, shape index: {1}]
  %28 = xla_tuple %s26, %s27
  %s29 = sld [smem:[#allocation0]]
  $region122: #{complete_net_forward.1} parent=0
    _
  %s31 = ssub.s32 1, %s29
  %s32 = scalar_select 0, %s31, %s29
  $region1: #{complete_net_forward.1} parent=0
    #allocation2 [shape = 'u8[8192]{0}', space=vmem, size = 0x2000, scoped, tag = 'output window, operand 0, single buffered']
    #allocation3 [shape = 's32[1]{0}', space=sflag, size = 0x4, scoped, tag = 'scoped memory for complete_net_forward.1']
    #allocation4 [shape = 'u8[512]{0}', space=vmem, size = 0x400, scoped, tag = 'output window, operand 1, single buffered']
    #allocation5 [shape = 's32[1]{0}', space=sflag, size = 0x4, scoped, tag = 'scoped memory for complete_net_forward.1']
    %33 = vsyncpa [#allocation3], 0
    %34 = vsyncpa [#allocation5], 0
    // Predicated region
    $region2: #{complete_net_forward.1} parent=1 // pred_check
      _
    $region3: #{complete_net_forward.1} parent=1 // pred_check_branch
      %36 = sbr.rel (0) target = $region5
    $region4: #{complete_net_forward.1} parent=1 // pred_region
      _
    $region5: #{complete_net_forward.1} parent=1 // pred_fallthru
      _
    // Predicated region
    $region6: #{complete_net_forward.1} parent=1 // pred_check
      _
    $region7: #{complete_net_forward.1} parent=1 // pred_check_branch
      %38 = sbr.rel (0) target = $region9
    $region8: #{complete_net_forward.1} parent=1 // pred_region
      _
    $region9: #{complete_net_forward.1} parent=1 // pred_fallthru
      _
    // Predicated region
    $region10: #{complete_net_forward.1} parent=1 // pred_check
      _
    $region11: #{complete_net_forward.1} parent=1 // pred_check_branch
      %40 = sbr.rel (0) target = $region13
    $region12: #{complete_net_forward.1} parent=1 // pred_region
      _
    $region13: #{complete_net_forward.1} parent=1 // pred_fallthru
      _
    // Predicated region
    $region14: #{complete_net_forward.1} parent=1 // pred_check
      _
    $region15: #{complete_net_forward.1} parent=1 // pred_check_branch
      %42 = sbr.rel (0) target = $region17
    $region16: #{complete_net_forward.1} parent=1 // pred_region
      _
    $region17: #{complete_net_forward.1} parent=1 // pred_fallthru
      _
    // Predicated region
    $region18: #{complete_net_forward.1} parent=1 // pred_check
      _
    $region19: #{complete_net_forward.1} parent=1 // pred_check_branch
      %44 = sbr.rel (0) target = $region21
    $region20: #{complete_net_forward.1} parent=1 // pred_region
      _
    $region21: #{complete_net_forward.1} parent=1 // pred_fallthru
      _
    // Predicated region
    $region22: #{complete_net_forward.1} parent=1 // pred_check
      _
    $region23: #{complete_net_forward.1} parent=1 // pred_check_branch
      %46 = sbr.rel (0) target = $region25
    $region24: #{complete_net_forward.1} parent=1 // pred_region
      _
    $region25: #{complete_net_forward.1} parent=1 // pred_fallthru
      _
    // Predicated region
    $region26: #{complete_net_forward.1} parent=1 // pred_check
      _
    $region27: #{complete_net_forward.1} parent=1 // pred_check_branch
      %48 = sbr.rel (0) target = $region29
    $region28: #{complete_net_forward.1} parent=1 // pred_region
      _
    $region29: #{complete_net_forward.1} parent=1 // pred_fallthru
      _
    // Predicated region
    $region30: #{complete_net_forward.1} parent=1 // pred_check
      _
    $region31: #{complete_net_forward.1} parent=1 // pred_check_branch
      %50 = sbr.rel (0) target = $region33
    $region32: #{complete_net_forward.1} parent=1 // pred_region
      _
    $region33: #{complete_net_forward.1} parent=1 // pred_fallthru
      _
    // Predicated region
    $region34: #{complete_net_forward.1} parent=1 // pred_check
      _
    $region35: #{complete_net_forward.1} parent=1 // pred_check_branch
      %52 = sbr.rel (0) target = $region37
    $region36: #{complete_net_forward.1} parent=1 // pred_region
      _
    $region37: #{complete_net_forward.1} parent=1 // pred_fallthru
      _
    // Predicated region
    $region38: #{complete_net_forward.1} parent=1 // pred_check
      _
    $region39: #{complete_net_forward.1} parent=1 // pred_check_branch
      %54 = sbr.rel (0) target = $region41
    $region40: #{complete_net_forward.1} parent=1 // pred_region
      _
    $region41: #{complete_net_forward.1} parent=1 // pred_fallthru
      _
    // Predicated region
    $region42: #{complete_net_forward.1} parent=1 // pred_check
      _
    $region43: #{complete_net_forward.1} parent=1 // pred_check_branch
      %56 = sbr.rel (0) target = $region45
    $region44: #{complete_net_forward.1} parent=1 // pred_region
      _
    $region45: #{complete_net_forward.1} parent=1 // pred_fallthru
      _
    // Predicated region
    $region46: #{complete_net_forward.1} parent=1 // pred_check
      _
    $region47: #{complete_net_forward.1} parent=1 // pred_check_branch
      %58 = sbr.rel (0) target = $region49
    $region48: #{complete_net_forward.1} parent=1 // pred_region
      _
    $region49: #{complete_net_forward.1} parent=1 // pred_fallthru
      _
    // Predicated region
    $region50: #{complete_net_forward.1} parent=1 // pred_check
      _
    $region51: #{complete_net_forward.1} parent=1 // pred_check_branch
      %60 = sbr.rel (0) target = $region53
    $region52: #{complete_net_forward.1} parent=1 // pred_region
      _
    $region53: #{complete_net_forward.1} parent=1 // pred_fallthru
      _
    // Predicated region
    $region54: #{complete_net_forward.1} parent=1 // pred_check
      _
    $region55: #{complete_net_forward.1} parent=1 // pred_check_branch
      %62 = sbr.rel (0) target = $region57
    $region56: #{complete_net_forward.1} parent=1 // pred_region
      _
    $region57: #{complete_net_forward.1} parent=1 // pred_fallthru
      _
    // Predicated region
    $region58: #{complete_net_forward.1} parent=1 // pred_check
      _
    $region59: #{complete_net_forward.1} parent=1 // pred_check_branch
      %64 = sbr.rel (0) target = $region61
    $region60: #{complete_net_forward.1} parent=1 // pred_region
      _
    $region61: #{complete_net_forward.1} parent=1 // pred_fallthru
      _
    // Predicated region
    $region62: #{complete_net_forward.1} parent=1 // pred_check
      _
    $region63: #{complete_net_forward.1} parent=1 // pred_check_branch
      %66 = sbr.rel (0) target = $region65
    $region64: #{complete_net_forward.1} parent=1 // pred_region
      _
    $region65: #{complete_net_forward.1} parent=1 // pred_fallthru
      _
    // Predicated region
    $region66: #{complete_net_forward.1} parent=1 // pred_check
      _
    $region67: #{complete_net_forward.1} parent=1 // pred_check_branch
      %68 = sbr.rel (0) target = $region69
    $region68: #{complete_net_forward.1} parent=1 // pred_region
      _
    $region69: #{complete_net_forward.1} parent=1 // pred_fallthru
      _
    // Predicated region
    $region70: #{complete_net_forward.1} parent=1 // pred_check
      _
    $region71: #{complete_net_forward.1} parent=1 // pred_check_branch
      %70 = sbr.rel (0) target = $region73
    $region72: #{complete_net_forward.1} parent=1 // pred_region
      _
    $region73: #{complete_net_forward.1} parent=1 // pred_fallthru
      _
    // Predicated region
    $region74: #{complete_net_forward.1} parent=1 // pred_check
      _
    $region75: #{complete_net_forward.1} parent=1 // pred_check_branch
      %72 = sbr.rel (0) target = $region77
    $region76: #{complete_net_forward.1} parent=1 // pred_region
      _
    $region77: #{complete_net_forward.1} parent=1 // pred_fallthru
      _
    // Predicated region
    $region78: #{complete_net_forward.1} parent=1 // pred_check
      _
    $region79: #{complete_net_forward.1} parent=1 // pred_check_branch
      %74 = sbr.rel (0) target = $region81
    $region80: #{complete_net_forward.1} parent=1 // pred_region
      _
    $region81: #{complete_net_forward.1} parent=1 // pred_fallthru
      _
    // Predicated region
    $region82: #{complete_net_forward.1} parent=1 // pred_check
      _
    $region83: #{complete_net_forward.1} parent=1 // pred_check_branch
      %76 = sbr.rel (0) target = $region85
    $region84: #{complete_net_forward.1} parent=1 // pred_region
      _
    $region85: #{complete_net_forward.1} parent=1 // pred_fallthru
      _
    // Predicated region
    $region86: #{complete_net_forward.1} parent=1 // pred_check
      _
    $region87: #{complete_net_forward.1} parent=1 // pred_check_branch
      %78 = sbr.rel (0) target = $region89
    $region88: #{complete_net_forward.1} parent=1 // pred_region
      _
    $region89: #{complete_net_forward.1} parent=1 // pred_fallthru
      _
    // Predicated region
    $region90: #{complete_net_forward.1} parent=1 // pred_check
      _
    $region91: #{complete_net_forward.1} parent=1 // pred_check_branch
      %80 = sbr.rel (0) target = $region93
    $region92: #{complete_net_forward.1} parent=1 // pred_region
      _
    $region93: #{complete_net_forward.1} parent=1 // pred_fallthru
      _
    // Predicated region
    $region94: #{complete_net_forward.1} parent=1 // pred_check
      _
    $region95: #{complete_net_forward.1} parent=1 // pred_check_branch
      %82 = sbr.rel (0) target = $region97
    $region96: #{complete_net_forward.1} parent=1 // pred_region
      _
    $region97: #{complete_net_forward.1} parent=1 // pred_fallthru
      _
    // Predicated region
    $region98: #{complete_net_forward.1} parent=1 // pred_check
      _
    $region99: #{complete_net_forward.1} parent=1 // pred_check_branch
      %84 = sbr.rel (0) target = $region101
    $region100: #{complete_net_forward.1} parent=1 // pred_region
      _
    $region101: #{complete_net_forward.1} parent=1 // pred_fallthru
      _
    // Predicated region
    $region102: #{complete_net_forward.1} parent=1 // pred_check
      _
    $region103: #{complete_net_forward.1} parent=1 // pred_check_branch
      %86 = sbr.rel (0) target = $region105
    $region104: #{complete_net_forward.1} parent=1 // pred_region
      _
    $region105: #{complete_net_forward.1} parent=1 // pred_fallthru
      _
    %v88 = vld [vmem:[%s0 + $0x1] sm:$0xff]
    %v89 = vld [vmem:[%s0 + $0x9] sm:$0xff]
    %v90 = vld [vmem:[%s2] sm:$0xff]
    %v91 = vld [vmem:[%s2 + $0x8] sm:$0xff]
    %v92 = vld [vmem:[%s3] sm:$0xff]
    %v93 = vld [vmem:[%s3 + $0x8] sm:$0xff]
    %v94 = vld [vmem:[%s4] sm:$0x1]
    %96 = vset.pattern.permute.xlu0 0
    %97 = vperm.xlu0 %96, %v92
    %v98 = vpop.permute.xlu0 %97
    %101 = vset.pattern.permute.xlu0 0
    %102 = vperm.xlu0 %101, %v93
    %v103 = vpop.permute.xlu0 %102
    %v105 = vperm.slane %v94, 0
    %v106 = vsub.f32 %v98, %v105
    %v107 = vsub.f32 %v103, %v105
    %v108 = vmul.f32 %v106, %v106
    %v109 = vmul.f32 %v107, %v107
    %v110 = vadd.f32 %v108, 0.0
    %v111 = vadd.f32 %v109, 0.0
    %v112 = vld [vmem:[%s4 + $0x1] sm:$0x1]
    %113 = vset.pattern.permute.xlu0 1
    %114 = vperm.xlu0 %113, %v92
    %v115 = vpop.permute.xlu0 %114
    %117 = vset.pattern.permute.xlu0 1
    %118 = vperm.xlu0 %117, %v93
    %v119 = vpop.permute.xlu0 %118
    %v121 = vperm.slane %v112, 0
    %v122 = vsub.f32 %v115, %v121
    %v123 = vsub.f32 %v119, %v121
    %v124 = vmul.f32 %v122, %v122
    %v125 = vmul.f32 %v123, %v123
    %v126 = vadd.f32 %v110, %v124
    %v127 = vadd.f32 %v111, %v125
    %v128 = vld [vmem:[%s4 + $0x2] sm:$0x1]
    %129 = vset.pattern.permute.xlu0 2
    %130 = vperm.xlu0 %129, %v92
    %v131 = vpop.permute.xlu0 %130
    %133 = vset.pattern.permute.xlu0 2
    %134 = vperm.xlu0 %133, %v93
    %v135 = vpop.permute.xlu0 %134
    %v137 = vperm.slane %v128, 0
    %v138 = vsub.f32 %v131, %v137
    %v139 = vsub.f32 %v135, %v137
    %v140 = vmul.f32 %v138, %v138
    %v141 = vmul.f32 %v139, %v139
    %v142 = vadd.f32 %v126, %v140
    %v143 = vadd.f32 %v127, %v141
    %v144 = vld [vmem:[%s4 + $0x3] sm:$0x1]
    %145 = vset.pattern.permute.xlu0 3
    %146 = vperm.xlu0 %145, %v92
    %v147 = vpop.permute.xlu0 %146
    %149 = vset.pattern.permute.xlu0 3
    %150 = vperm.xlu0 %149, %v93
    %v151 = vpop.permute.xlu0 %150
    %v153 = vperm.slane %v144, 0
    %v154 = vsub.f32 %v147, %v153
    %v155 = vsub.f32 %v151, %v153
    %v156 = vmul.f32 %v154, %v154
    %v157 = vmul.f32 %v155, %v155
    %v158 = vadd.f32 %v142, %v156
    %v159 = vadd.f32 %v143, %v157
    %v160 = vsub.f32 1.0, %v158
    %v161 = vsub.f32 1.0, %v159
    %v162 = vmax.f32 %v160, 0.0
    %v163 = vmax.f32 %v161, 0.0
    %v164 = vmul.f32 %v90, %v162
    %v165 = vmul.f32 %v91, %v163
    %v166 = vpack.c.bf16 %v89, %v88
    %v167 = vpack.c.bf16 %v165, %v164
    %v168 = vld [vmem:[%s5] sm:$0x1]
    %v170 = vperm.slane %v168, 0
    %173 = vrot.lane.b32.xlu0 %v166, 127
    %v174 = vpop.permute.xlu0 %173
    %vm175 = vcmask 130048
    %v177 = vsel %vm175, %v174, 0
    %179 = vmatpush.bf16.msra.mxu0 0
    %180 = vmatpush.bf16.msra.mxu0 0
    %181 = vmatpush.bf16.msra.mxu0 0
    %182 = vmatpush.bf16.msra.mxu0 0
    %183 = vmatpush.bf16.msra.mxu0 0
    %184 = vmatpush.bf16.msra.mxu0 0
    %185 = vmatpush.bf16.msra.mxu0 0
    %186 = vmatpush.bf16.msra.mxu0 %v167
    %187 = vmatmul.bf16.gmra.mxu0 %v177
    %v188 = vpop.f32.mrf.mxu0
    %v189 = vadd.f32 %v170, %v188
    %v190 = vpop.f32.mrf.mxu0
    %v191 = vadd.f32 %v170, %v190
    %192 = vdwg.mxu0
    %v193 = vxor.u32 %v189, 2147483648
    %v194 = vxor.u32 %v191, 2147483648
    %v195 = vmul.f32 %v193, 1.442695
    %v196 = vpow.pop %v195
    %v197 = vmul.f32 %v194, 1.442695
    %v198 = vpow.pop %v197
    %v199 = vadd.f32 %v196, 1.0
    %v200 = vadd.f32 %v198, 1.0
    %v201 = vrcp.pop %v199
    %v202 = vmul.f32 %v199, %v201
    %v203 = vsub.f32 1.0, %v202
    %v204 = vmul.f32 %v201, %v203
    %v205 = vadd.f32 %v201, %v204
    %vm206 = vweird.f32 %v199
    %vm207 = vweird.f32 %v201
    %vm208 = vmor %vm206, %vm207
    %v209 = vsel %vm208, %v201, %v205
    %v210 = vand.u32 2147483647, %v199
    %vm211 = vcmp.eq.f32.partialorder %v210, 8.507059e+37
    %v212 = vand.u32 %v199, 2147483648
    %v213 = vor.u32 1.1754944e-38, %v212
    %v214 = vsel %vm211, %v213, %v209
    %v215 = vmul.f32 1.0, %v214
    %v216 = vrcp.pop %v200
    %v217 = vmul.f32 %v200, %v216
    %v218 = vsub.f32 1.0, %v217
    %v219 = vmul.f32 %v216, %v218
    %v220 = vadd.f32 %v216, %v219
    %vm221 = vweird.f32 %v200
    %vm222 = vweird.f32 %v216
    %vm223 = vmor %vm221, %vm222
    %v224 = vsel %vm223, %v216, %v220
    %v225 = vand.u32 2147483647, %v200
    %vm226 = vcmp.eq.f32.partialorder %v225, 8.507059e+37
    %v227 = vand.u32 %v200, 2147483648
    %v228 = vor.u32 1.1754944e-38, %v227
    %v229 = vsel %vm226, %v228, %v224
    %v230 = vmul.f32 1.0, %v229
    %v231 = vld [vmem:[%s6] sm:$0xff]
    %v232 = vld [vmem:[%s6 + $0x8] sm:$0xff]
    %v233 = vld [vmem:[%s6 + $0x10] sm:$0xff]
    %v234 = vld [vmem:[%s6 + $0x18] sm:$0xff]
    %v235 = vld [vmem:[%s7] sm:$0xff]
    %v236 = vld [vmem:[%s7 + $0x8] sm:$0xff]
    %v237 = vld [vmem:[%s7 + $0x10] sm:$0xff]
    %v238 = vld [vmem:[%s7 + $0x18] sm:$0xff]
    %v239 = vld [vmem:[%s8] sm:$0x1]
    %241 = vset.pattern.permute.xlu0 0
    %242 = vperm.xlu0 %241, %v235
    %v243 = vpop.permute.xlu0 %242
    %246 = vset.pattern.permute.xlu0 0
    %247 = vperm.xlu0 %246, %v236
    %v248 = vpop.permute.xlu0 %247
    %251 = vset.pattern.permute.xlu0 0
    %252 = vperm.xlu0 %251, %v237
    %v253 = vpop.permute.xlu0 %252
    %256 = vset.pattern.permute.xlu0 0
    %257 = vperm.xlu0 %256, %v238
    %v258 = vpop.permute.xlu0 %257
    %v260 = vperm.slane %v239, 0
    %v261 = vsub.f32 %v243, %v260
    %v262 = vsub.f32 %v248, %v260
    %v263 = vsub.f32 %v253, %v260
    %v264 = vsub.f32 %v258, %v260
    %v265 = vmul.f32 %v261, %v261
    %v266 = vmul.f32 %v262, %v262
    %v267 = vmul.f32 %v263, %v263
    %v268 = vmul.f32 %v264, %v264
    %v269 = vadd.f32 %v265, 0.0
    %v270 = vadd.f32 %v266, 0.0
    %v271 = vadd.f32 %v267, 0.0
    %v272 = vadd.f32 %v268, 0.0
    %v273 = vld [vmem:[%s8 + $0x1] sm:$0x1]
    %274 = vset.pattern.permute.xlu0 1
    %275 = vperm.xlu0 %274, %v235
    %v276 = vpop.permute.xlu0 %275
    %278 = vset.pattern.permute.xlu0 1
    %279 = vperm.xlu0 %278, %v236
    %v280 = vpop.permute.xlu0 %279
    %282 = vset.pattern.permute.xlu0 1
    %283 = vperm.xlu0 %282, %v237
    %v284 = vpop.permute.xlu0 %283
    %286 = vset.pattern.permute.xlu0 1
    %287 = vperm.xlu0 %286, %v238
    %v288 = vpop.permute.xlu0 %287
    %v290 = vperm.slane %v273, 0
    %v291 = vsub.f32 %v276, %v290
    %v292 = vsub.f32 %v280, %v290
    %v293 = vsub.f32 %v284, %v290
    %v294 = vsub.f32 %v288, %v290
    %v295 = vmul.f32 %v291, %v291
    %v296 = vmul.f32 %v292, %v292
    %v297 = vmul.f32 %v293, %v293
    %v298 = vmul.f32 %v294, %v294
    %v299 = vadd.f32 %v269, %v295
    %v300 = vadd.f32 %v270, %v296
    %v301 = vadd.f32 %v271, %v297
    %v302 = vadd.f32 %v272, %v298
    %v303 = vld [vmem:[%s8 + $0x2] sm:$0x1]
    %304 = vset.pattern.permute.xlu0 2
    %305 = vperm.xlu0 %304, %v235
    %v306 = vpop.permute.xlu0 %305
    %308 = vset.pattern.permute.xlu0 2
    %309 = vperm.xlu0 %308, %v236
    %v310 = vpop.permute.xlu0 %309
    %312 = vset.pattern.permute.xlu0 2
    %313 = vperm.xlu0 %312, %v237
    %v314 = vpop.permute.xlu0 %313
    %316 = vset.pattern.permute.xlu0 2
    %317 = vperm.xlu0 %316, %v238
    %v318 = vpop.permute.xlu0 %317
    %v320 = vperm.slane %v303, 0
    %v321 = vsub.f32 %v306, %v320
    %v322 = vsub.f32 %v310, %v320
    %v323 = vsub.f32 %v314, %v320
    %v324 = vsub.f32 %v318, %v320
    %v325 = vmul.f32 %v321, %v321
    %v326 = vmul.f32 %v322, %v322
    %v327 = vmul.f32 %v323, %v323
    %v328 = vmul.f32 %v324, %v324
    %v329 = vadd.f32 %v299, %v325
    %v330 = vadd.f32 %v300, %v326
    %v331 = vadd.f32 %v301, %v327
    %v332 = vadd.f32 %v302, %v328
    %v333 = vld [vmem:[%s8 + $0x3] sm:$0x1]
    %334 = vset.pattern.permute.xlu0 3
    %335 = vperm.xlu0 %334, %v235
    %v336 = vpop.permute.xlu0 %335
    %338 = vset.pattern.permute.xlu0 3
    %339 = vperm.xlu0 %338, %v236
    %v340 = vpop.permute.xlu0 %339
    %342 = vset.pattern.permute.xlu0 3
    %343 = vperm.xlu0 %342, %v237
    %v344 = vpop.permute.xlu0 %343
    %346 = vset.pattern.permute.xlu0 3
    %347 = vperm.xlu0 %346, %v238
    %v348 = vpop.permute.xlu0 %347
    %v350 = vperm.slane %v333, 0
    %v351 = vsub.f32 %v336, %v350
    %v352 = vsub.f32 %v340, %v350
    %v353 = vsub.f32 %v344, %v350
    %v354 = vsub.f32 %v348, %v350
    %v355 = vmul.f32 %v351, %v351
    %v356 = vmul.f32 %v352, %v352
    %v357 = vmul.f32 %v353, %v353
    %v358 = vmul.f32 %v354, %v354
    %v359 = vadd.f32 %v329, %v355
    %v360 = vadd.f32 %v330, %v356
    %v361 = vadd.f32 %v331, %v357
    %v362 = vadd.f32 %v332, %v358
    %v363 = vsub.f32 1.0, %v359
    %v364 = vsub.f32 1.0, %v360
    %v365 = vsub.f32 1.0, %v361
    %v366 = vsub.f32 1.0, %v362
    %v367 = vmax.f32 %v363, 0.0
    %v368 = vmax.f32 %v364, 0.0
    %v369 = vmax.f32 %v365, 0.0
    %v370 = vmax.f32 %v366, 0.0
    %v371 = vmul.f32 %v231, %v367
    %v372 = vmul.f32 %v232, %v368
    %v373 = vmul.f32 %v233, %v369
    %v374 = vmul.f32 %v234, %v370
    %v375 = vpack.c.bf16 %v230, %v215
    %v376 = vpack.c.bf16 %v372, %v371
    %v377 = vpack.c.bf16 %v374, %v373
    %v378 = vld [vmem:[%s9] sm:$0x1]
    %v380 = vperm.slane %v378, 0
    %vm382 = vcmask 261120
    %v384 = vsel %vm382, %v375, 0
    %386 = vmatpush.bf16.msra.mxu0 0
    %387 = vmatpush.bf16.msra.mxu0 0
    %388 = vmatpush.bf16.msra.mxu0 0
    %389 = vmatpush.bf16.msra.mxu0 0
    %390 = vmatpush.bf16.msra.mxu0 0
    %391 = vmatpush.bf16.msra.mxu0 0
    %392 = vmatpush.bf16.msra.mxu0 %v377
    %393 = vmatpush.bf16.msra.mxu0 %v376
    %394 = vmatmul.bf16.gmra.mxu0 %v384
    %v395 = vpop.f32.mrf.mxu0
    %v396 = vadd.f32 %v380, %v395
    %v397 = vpop.f32.mrf.mxu0
    %v398 = vadd.f32 %v380, %v397
    %399 = vdwg.mxu0
    %v400 = vxor.u32 %v396, 2147483648
    %v401 = vxor.u32 %v398, 2147483648
    %v402 = vmul.f32 %v400, 1.442695
    %v403 = vpow.pop %v402
    %v404 = vmul.f32 %v401, 1.442695
    %v405 = vpow.pop %v404
    %v406 = vadd.f32 %v403, 1.0
    %v407 = vadd.f32 %v405, 1.0
    %v408 = vrcp.pop %v406
    %v409 = vmul.f32 %v406, %v408
    %v410 = vsub.f32 1.0, %v409
    %v411 = vmul.f32 %v408, %v410
    %v412 = vadd.f32 %v408, %v411
    %vm413 = vweird.f32 %v406
    %vm414 = vweird.f32 %v408
    %vm415 = vmor %vm413, %vm414
    %v416 = vsel %vm415, %v408, %v412
    %v417 = vand.u32 2147483647, %v406
    %vm418 = vcmp.eq.f32.partialorder %v417, 8.507059e+37
    %v419 = vand.u32 %v406, 2147483648
    %v420 = vor.u32 1.1754944e-38, %v419
    %v421 = vsel %vm418, %v420, %v416
    %v422 = vmul.f32 1.0, %v421
    %v423 = vrcp.pop %v407
    %v424 = vmul.f32 %v407, %v423
    %v425 = vsub.f32 1.0, %v424
    %v426 = vmul.f32 %v423, %v425
    %v427 = vadd.f32 %v423, %v426
    %vm428 = vweird.f32 %v407
    %vm429 = vweird.f32 %v423
    %vm430 = vmor %vm428, %vm429
    %v431 = vsel %vm430, %v423, %v427
    %v432 = vand.u32 2147483647, %v407
    %vm433 = vcmp.eq.f32.partialorder %v432, 8.507059e+37
    %v434 = vand.u32 %v407, 2147483648
    %v435 = vor.u32 1.1754944e-38, %v434
    %v436 = vsel %vm433, %v435, %v431
    %v437 = vmul.f32 1.0, %v436
    %v438 = vld [vmem:[%s10] sm:$0xff]
    %v439 = vld [vmem:[%s10 + $0x8] sm:$0xff]
    %v440 = vld [vmem:[%s10 + $0x10] sm:$0xff]
    %v441 = vld [vmem:[%s10 + $0x18] sm:$0xff]
    %v442 = vld [vmem:[%s11] sm:$0xff]
    %v443 = vld [vmem:[%s11 + $0x8] sm:$0xff]
    %v444 = vld [vmem:[%s11 + $0x10] sm:$0xff]
    %v445 = vld [vmem:[%s11 + $0x18] sm:$0xff]
    %v446 = vld [vmem:[%s12] sm:$0x1]
    %448 = vset.pattern.permute.xlu0 0
    %449 = vperm.xlu0 %448, %v442
    %v450 = vpop.permute.xlu0 %449
    %453 = vset.pattern.permute.xlu0 0
    %454 = vperm.xlu0 %453, %v443
    %v455 = vpop.permute.xlu0 %454
    %458 = vset.pattern.permute.xlu0 0
    %459 = vperm.xlu0 %458, %v444
    %v460 = vpop.permute.xlu0 %459
    %463 = vset.pattern.permute.xlu0 0
    %464 = vperm.xlu0 %463, %v445
    %v465 = vpop.permute.xlu0 %464
    %v467 = vperm.slane %v446, 0
    %v468 = vsub.f32 %v450, %v467
    %v469 = vsub.f32 %v455, %v467
    %v470 = vsub.f32 %v460, %v467
    %v471 = vsub.f32 %v465, %v467
    %v472 = vmul.f32 %v468, %v468
    %v473 = vmul.f32 %v469, %v469
    %v474 = vmul.f32 %v470, %v470
    %v475 = vmul.f32 %v471, %v471
    %v476 = vadd.f32 %v472, 0.0
    %v477 = vadd.f32 %v473, 0.0
    %v478 = vadd.f32 %v474, 0.0
    %v479 = vadd.f32 %v475, 0.0
    %v480 = vld [vmem:[%s12 + $0x1] sm:$0x1]
    %481 = vset.pattern.permute.xlu0 1
    %482 = vperm.xlu0 %481, %v442
    %v483 = vpop.permute.xlu0 %482
    %485 = vset.pattern.permute.xlu0 1
    %486 = vperm.xlu0 %485, %v443
    %v487 = vpop.permute.xlu0 %486
    %489 = vset.pattern.permute.xlu0 1
    %490 = vperm.xlu0 %489, %v444
    %v491 = vpop.permute.xlu0 %490
    %493 = vset.pattern.permute.xlu0 1
    %494 = vperm.xlu0 %493, %v445
    %v495 = vpop.permute.xlu0 %494
    %v497 = vperm.slane %v480, 0
    %v498 = vsub.f32 %v483, %v497
    %v499 = vsub.f32 %v487, %v497
    %v500 = vsub.f32 %v491, %v497
    %v501 = vsub.f32 %v495, %v497
    %v502 = vmul.f32 %v498, %v498
    %v503 = vmul.f32 %v499, %v499
    %v504 = vmul.f32 %v500, %v500
    %v505 = vmul.f32 %v501, %v501
    %v506 = vadd.f32 %v476, %v502
    %v507 = vadd.f32 %v477, %v503
    %v508 = vadd.f32 %v478, %v504
    %v509 = vadd.f32 %v479, %v505
    %v510 = vld [vmem:[%s12 + $0x2] sm:$0x1]
    %511 = vset.pattern.permute.xlu0 2
    %512 = vperm.xlu0 %511, %v442
    %v513 = vpop.permute.xlu0 %512
    %515 = vset.pattern.permute.xlu0 2
    %516 = vperm.xlu0 %515, %v443
    %v517 = vpop.permute.xlu0 %516
    %519 = vset.pattern.permute.xlu0 2
    %520 = vperm.xlu0 %519, %v444
    %v521 = vpop.permute.xlu0 %520
    %523 = vset.pattern.permute.xlu0 2
    %524 = vperm.xlu0 %523, %v445
    %v525 = vpop.permute.xlu0 %524
    %v527 = vperm.slane %v510, 0
    %v528 = vsub.f32 %v513, %v527
    %v529 = vsub.f32 %v517, %v527
    %v530 = vsub.f32 %v521, %v527
    %v531 = vsub.f32 %v525, %v527
    %v532 = vmul.f32 %v528, %v528
    %v533 = vmul.f32 %v529, %v529
    %v534 = vmul.f32 %v530, %v530
    %v535 = vmul.f32 %v531, %v531
    %v536 = vadd.f32 %v506, %v532
    %v537 = vadd.f32 %v507, %v533
    %v538 = vadd.f32 %v508, %v534
    %v539 = vadd.f32 %v509, %v535
    %v540 = vld [vmem:[%s12 + $0x3] sm:$0x1]
    %541 = vset.pattern.permute.xlu0 3
    %542 = vperm.xlu0 %541, %v442
    %v543 = vpop.permute.xlu0 %542
    %545 = vset.pattern.permute.xlu0 3
    %546 = vperm.xlu0 %545, %v443
    %v547 = vpop.permute.xlu0 %546
    %549 = vset.pattern.permute.xlu0 3
    %550 = vperm.xlu0 %549, %v444
    %v551 = vpop.permute.xlu0 %550
    %553 = vset.pattern.permute.xlu0 3
    %554 = vperm.xlu0 %553, %v445
    %v555 = vpop.permute.xlu0 %554
    %v557 = vperm.slane %v540, 0
    %v558 = vsub.f32 %v543, %v557
    %v559 = vsub.f32 %v547, %v557
    %v560 = vsub.f32 %v551, %v557
    %v561 = vsub.f32 %v555, %v557
    %v562 = vmul.f32 %v558, %v558
    %v563 = vmul.f32 %v559, %v559
    %v564 = vmul.f32 %v560, %v560
    %v565 = vmul.f32 %v561, %v561
    %v566 = vadd.f32 %v536, %v562
    %v567 = vadd.f32 %v537, %v563
    %v568 = vadd.f32 %v538, %v564
    %v569 = vadd.f32 %v539, %v565
    %v570 = vsub.f32 1.0, %v566
    %v571 = vsub.f32 1.0, %v567
    %v572 = vsub.f32 1.0, %v568
    %v573 = vsub.f32 1.0, %v569
    %v574 = vmax.f32 %v570, 0.0
    %v575 = vmax.f32 %v571, 0.0
    %v576 = vmax.f32 %v572, 0.0
    %v577 = vmax.f32 %v573, 0.0
    %v578 = vmul.f32 %v438, %v574
    %v579 = vmul.f32 %v439, %v575
    %v580 = vmul.f32 %v440, %v576
    %v581 = vmul.f32 %v441, %v577
    %v582 = vpack.c.bf16 %v437, %v422
    %v583 = vpack.c.bf16 %v579, %v578
    %v584 = vpack.c.bf16 %v581, %v580
    %v585 = vld [vmem:[%s13] sm:$0x1]
    %v587 = vperm.slane %v585, 0
    %v590 = vsel %vm382, %v582, 0
    %592 = vmatpush.bf16.msra.mxu0 0
    %593 = vmatpush.bf16.msra.mxu0 0
    %594 = vmatpush.bf16.msra.mxu0 0
    %595 = vmatpush.bf16.msra.mxu0 0
    %596 = vmatpush.bf16.msra.mxu0 0
    %597 = vmatpush.bf16.msra.mxu0 0
    %598 = vmatpush.bf16.msra.mxu0 %v584
    %599 = vmatpush.bf16.msra.mxu0 %v583
    %600 = vmatmul.bf16.gmra.mxu0 %v590
    %v601 = vpop.f32.mrf.mxu0
    %v602 = vadd.f32 %v587, %v601
    %v603 = vpop.f32.mrf.mxu0
    %v604 = vadd.f32 %v587, %v603
    %605 = vdwg.mxu0
    %v606 = vsel %vm175, %v602, 0.0
    %v607 = vsel %vm175, %v604, 0.0
    %v608 = vadd.f32 %v606, %v607
    %v609 = vrot.slane %v608, 4
    %v610 = vadd.f32 %v608, %v609
    %v611 = vrot.slane %v610, 2
    %v612 = vadd.f32 %v610, %v611
    %v613 = vrot.slane %v612, 1
    %v614 = vadd.f32 %v612, %v613
    %v615 = vmul.f32 %v614, 0.0625
    %v616 = vpack.c.bf16 %v615, %v615
    %v617 = vld [vmem:[%s1] sm:$0xff]
    %v618 = vld [vmem:[%s1 + $0x8] sm:$0xff]
    %v619 = vpack.c.bf16 %v618, %v617
    %v621 = vsel %vm175, %v616, 0
    %623 = vmatpush.bf16.msra.mxu0 0
    %624 = vmatpush.bf16.msra.mxu0 0
    %625 = vmatpush.bf16.msra.mxu0 0
    %626 = vmatpush.bf16.msra.mxu0 0
    %627 = vmatpush.bf16.msra.mxu0 0
    %628 = vmatpush.bf16.msra.mxu0 0
    %629 = vmatpush.bf16.msra.mxu0 0
    %630 = vmatpush.bf16.msra.mxu0 %v619
    %631 = vmatmul.bf16.gmra.mxu0 %v621
    %v632 = vpop.f32.mrf.mxu0
    %v633 = vadd.f32 0.0, %v632
    %v634 = vpop.f32.mrf.mxu0
    %635 = vdwg.mxu0
    %v636 = vld [vmem:[%s0] sm:$0xff]
    %v637 = vld [vmem:[%s0 + $0x8] sm:$0xff]
    %s639 = vtos %v633
    %v640 = vstv %s639
    %v642 = vmul.f32 %v640, %v636
    %v643 = vmul.f32 %v640, %v637
    %v644 = vadd.f32 %v642, 0.0
    %v645 = vadd.f32 %v643, 0.0
    %646 = vrot.lane.b32.xlu0 %v633, 127
    %v647 = vpop.permute.xlu0 %646
    %s648 = vtos %v647
    %v649 = vstv %s648
    %v651 = vmul.f32 %v649, %v636
    %v652 = vmul.f32 %v649, %v637
    %655 = vrot.lane.b32.xlu0 %v651, 127
    %v656 = vpop.permute.xlu0 %655
    %657 = vrot.lane.b32.xlu0 %v652, 127
    %v658 = vpop.permute.xlu0 %657
    %v661 = vadd.f32 %v644, %v656
    %v662 = vadd.f32 %v645, %v658
    %663 = vrot.lane.b32.xlu0 %v633, 126
    %v664 = vpop.permute.xlu0 %663
    %s665 = vtos %v664
    %v666 = vstv %s665
    %v668 = vmul.f32 %v666, %v636
    %v669 = vmul.f32 %v666, %v637
    %672 = vrot.lane.b32.xlu0 %v668, 126
    %v673 = vpop.permute.xlu0 %672
    %674 = vrot.lane.b32.xlu0 %v669, 126
    %v675 = vpop.permute.xlu0 %674
    %v678 = vadd.f32 %v661, %v673
    %v679 = vadd.f32 %v662, %v675
    %680 = vrot.lane.b32.xlu0 %v633, 125
    %v681 = vpop.permute.xlu0 %680
    %s682 = vtos %v681
    %v683 = vstv %s682
    %v685 = vmul.f32 %v683, %v88
    %v686 = vmul.f32 %v683, %v89
    %v687 = vadd.f32 %v678, %v685
    %v688 = vadd.f32 %v679, %v686
    %689 = vrot.lane.b32.xlu0 %v633, 124
    %v690 = vpop.permute.xlu0 %689
    %s691 = vtos %v690
    %v692 = vstv %s691
    %v694 = vmul.f32 %v692, %v88
    %v695 = vmul.f32 %v692, %v89
    %698 = vrot.lane.b32.xlu0 %v694, 127
    %v699 = vpop.permute.xlu0 %698
    %700 = vrot.lane.b32.xlu0 %v695, 127
    %v701 = vpop.permute.xlu0 %700
    %v704 = vadd.f32 %v687, %v699
    %v705 = vadd.f32 %v688, %v701
    %706 = vrot.lane.b32.xlu0 %v633, 123
    %v707 = vpop.permute.xlu0 %706
    %s708 = vtos %v707
    %v709 = vstv %s708
    %v711 = vmul.f32 %v709, %v88
    %v712 = vmul.f32 %v709, %v89
    %715 = vrot.lane.b32.xlu0 %v711, 126
    %v716 = vpop.permute.xlu0 %715
    %717 = vrot.lane.b32.xlu0 %v712, 126
    %v718 = vpop.permute.xlu0 %717
    %v721 = vadd.f32 %v704, %v716
    %v722 = vadd.f32 %v705, %v718
    %v723 = vld [vmem:[%s0 + $0x2] sm:$0xff]
    %v724 = vld [vmem:[%s0 + $0xa] sm:$0xff]
    %725 = vrot.lane.b32.xlu0 %v633, 122
    %v726 = vpop.permute.xlu0 %725
    %s727 = vtos %v726
    %v728 = vstv %s727
    %v730 = vmul.f32 %v728, %v723
    %v731 = vmul.f32 %v728, %v724
    %v732 = vadd.f32 %v721, %v730
    %v733 = vadd.f32 %v722, %v731
    %734 = vrot.lane.b32.xlu0 %v633, 121
    %v735 = vpop.permute.xlu0 %734
    %s736 = vtos %v735
    %v737 = vstv %s736
    %v739 = vmul.f32 %v737, %v723
    %v740 = vmul.f32 %v737, %v724
    %743 = vrot.lane.b32.xlu0 %v739, 127
    %v744 = vpop.permute.xlu0 %743
    %745 = vrot.lane.b32.xlu0 %v740, 127
    %v746 = vpop.permute.xlu0 %745
    %v749 = vadd.f32 %v732, %v744
    %v750 = vadd.f32 %v733, %v746
    %751 = vrot.lane.b32.xlu0 %v633, 120
    %v752 = vpop.permute.xlu0 %751
    %s753 = vtos %v752
    %v754 = vstv %s753
    %v756 = vmul.f32 %v754, %v723
    %v757 = vmul.f32 %v754, %v724
    %760 = vrot.lane.b32.xlu0 %v756, 126
    %v761 = vpop.permute.xlu0 %760
    %762 = vrot.lane.b32.xlu0 %v757, 126
    %v763 = vpop.permute.xlu0 %762
    %v766 = vadd.f32 %v749, %v761
    %v767 = vadd.f32 %v750, %v763
    %vm768 = vcmp.gt.f32.partialorder %v766, 0.0
    %vm769 = vcmp.gt.f32.partialorder %v767, 0.0
    %v770 = vmul.f32 %v766, 0.01
    %v771 = vmul.f32 %v767, 0.01
    %v772 = vsel %vm768, %v766, %v770
    %v773 = vsel %vm769, %v767, %v771
    %v774 = vld [vmem:[%s14] sm:$0xff]
    %v775 = vld [vmem:[%s14 + $0x8] sm:$0xff]
    %v776 = vld [vmem:[%s15] sm:$0xff]
    %v777 = vld [vmem:[%s15 + $0x8] sm:$0xff]
    %v778 = vld [vmem:[%s16] sm:$0x1]
    %780 = vset.pattern.permute.xlu0 0
    %781 = vperm.xlu0 %780, %v776
    %v782 = vpop.permute.xlu0 %781
    %785 = vset.pattern.permute.xlu0 0
    %786 = vperm.xlu0 %785, %v777
    %v787 = vpop.permute.xlu0 %786
    %v789 = vperm.slane %v778, 0
    %v790 = vsub.f32 %v782, %v789
    %v791 = vsub.f32 %v787, %v789
    %v792 = vmul.f32 %v790, %v790
    %v793 = vmul.f32 %v791, %v791
    %v794 = vadd.f32 %v792, 0.0
    %v795 = vadd.f32 %v793, 0.0
    %v796 = vld [vmem:[%s16 + $0x1] sm:$0x1]
    %797 = vset.pattern.permute.xlu0 1
    %798 = vperm.xlu0 %797, %v776
    %v799 = vpop.permute.xlu0 %798
    %801 = vset.pattern.permute.xlu0 1
    %802 = vperm.xlu0 %801, %v777
    %v803 = vpop.permute.xlu0 %802
    %v805 = vperm.slane %v796, 0
    %v806 = vsub.f32 %v799, %v805
    %v807 = vsub.f32 %v803, %v805
    %v808 = vmul.f32 %v806, %v806
    %v809 = vmul.f32 %v807, %v807
    %v810 = vadd.f32 %v794, %v808
    %v811 = vadd.f32 %v795, %v809
    %v812 = vld [vmem:[%s16 + $0x2] sm:$0x1]
    %813 = vset.pattern.permute.xlu0 2
    %814 = vperm.xlu0 %813, %v776
    %v815 = vpop.permute.xlu0 %814
    %817 = vset.pattern.permute.xlu0 2
    %818 = vperm.xlu0 %817, %v777
    %v819 = vpop.permute.xlu0 %818
    %v821 = vperm.slane %v812, 0
    %v822 = vsub.f32 %v815, %v821
    %v823 = vsub.f32 %v819, %v821
    %v824 = vmul.f32 %v822, %v822
    %v825 = vmul.f32 %v823, %v823
    %v826 = vadd.f32 %v810, %v824
    %v827 = vadd.f32 %v811, %v825
    %v828 = vld [vmem:[%s16 + $0x3] sm:$0x1]
    %829 = vset.pattern.permute.xlu0 3
    %830 = vperm.xlu0 %829, %v776
    %v831 = vpop.permute.xlu0 %830
    %833 = vset.pattern.permute.xlu0 3
    %834 = vperm.xlu0 %833, %v777
    %v835 = vpop.permute.xlu0 %834
    %v837 = vperm.slane %v828, 0
    %v838 = vsub.f32 %v831, %v837
    %v839 = vsub.f32 %v835, %v837
    %v840 = vmul.f32 %v838, %v838
    %v841 = vmul.f32 %v839, %v839
    %v842 = vadd.f32 %v826, %v840
    %v843 = vadd.f32 %v827, %v841
    %v844 = vsub.f32 1.0, %v842
    %v845 = vsub.f32 1.0, %v843
    %v846 = vmax.f32 %v844, 0.0
    %v847 = vmax.f32 %v845, 0.0
    %v848 = vmul.f32 %v774, %v846
    %v849 = vmul.f32 %v775, %v847
    %v850 = vpack.c.bf16 %v773, %v772
    %v851 = vpack.c.bf16 %v849, %v848
    %v852 = vld [vmem:[%s17] sm:$0x1]
    %v854 = vperm.slane %v852, 0
    %v857 = vsel %vm175, %v850, 0
    %859 = vmatpush.bf16.msra.mxu0 0
    %860 = vmatpush.bf16.msra.mxu0 0
    %861 = vmatpush.bf16.msra.mxu0 0
    %862 = vmatpush.bf16.msra.mxu0 0
    %863 = vmatpush.bf16.msra.mxu0 0
    %864 = vmatpush.bf16.msra.mxu0 0
    %865 = vmatpush.bf16.msra.mxu0 0
    %866 = vmatpush.bf16.msra.mxu0 %v851
    %867 = vmatmul.bf16.gmra.mxu0 %v857
    %v868 = vpop.f32.mrf.mxu0
    %v869 = vadd.f32 %v854, %v868
    %v870 = vpop.f32.mrf.mxu0
    %v871 = vadd.f32 %v854, %v870
    %872 = vdwg.mxu0
    %v873 = vxor.u32 %v869, 2147483648
    %v874 = vxor.u32 %v871, 2147483648
    %v875 = vmul.f32 %v873, 1.442695
    %v876 = vpow.pop %v875
    %v877 = vmul.f32 %v874, 1.442695
    %v878 = vpow.pop %v877
    %v879 = vadd.f32 %v876, 1.0
    %v880 = vadd.f32 %v878, 1.0
    %v881 = vrcp.pop %v879
    %v882 = vmul.f32 %v879, %v881
    %v883 = vsub.f32 1.0, %v882
    %v884 = vmul.f32 %v881, %v883
    %v885 = vadd.f32 %v881, %v884
    %vm886 = vweird.f32 %v879
    %vm887 = vweird.f32 %v881
    %vm888 = vmor %vm886, %vm887
    %v889 = vsel %vm888, %v881, %v885
    %v890 = vand.u32 2147483647, %v879
    %vm891 = vcmp.eq.f32.partialorder %v890, 8.507059e+37
    %v892 = vand.u32 %v879, 2147483648
    %v893 = vor.u32 1.1754944e-38, %v892
    %v894 = vsel %vm891, %v893, %v889
    %v895 = vmul.f32 1.0, %v894
    %v896 = vrcp.pop %v880
    %v897 = vmul.f32 %v880, %v896
    %v898 = vsub.f32 1.0, %v897
    %v899 = vmul.f32 %v896, %v898
    %v900 = vadd.f32 %v896, %v899
    %vm901 = vweird.f32 %v880
    %vm902 = vweird.f32 %v896
    %vm903 = vmor %vm901, %vm902
    %v904 = vsel %vm903, %v896, %v900
    %v905 = vand.u32 2147483647, %v880
    %vm906 = vcmp.eq.f32.partialorder %v905, 8.507059e+37
    %v907 = vand.u32 %v880, 2147483648
    %v908 = vor.u32 1.1754944e-38, %v907
    %v909 = vsel %vm906, %v908, %v904
    %v910 = vmul.f32 1.0, %v909
    %v911 = vmul.f32 %v846, %v846
    %v912 = vmul.f32 %v847, %v847
    %v913 = vsel %vm382, %v911, 0.0
    %v914 = vsel %vm382, %v912, 0.0
    %v915 = vadd.f32 %v913, %v914
    %v916 = vrot.slane %v915, 4
    %v917 = vadd.f32 %v915, %v916
    %v918 = vrot.slane %v917, 2
    %v919 = vadd.f32 %v917, %v918
    %v920 = vrot.slane %v919, 1
    %v921 = vadd.f32 %v919, %v920
    %v922 = vsel %vm382, %v921, 0.0
    %923 = vadd.xlane.f32.xlu0 %v922
    %v924 = vpop.xlane.xlu0 %923
    %v925 = vmul.f32 %v924, 0.001953125
    %v926 = vmul.f32 %v774, %v774
    %v927 = vmul.f32 %v775, %v775
    %v928 = vsel %vm382, %v926, 0.0
    %v929 = vsel %vm382, %v927, 0.0
    %v930 = vadd.f32 %v928, %v929
    %v931 = vrot.slane %v930, 4
    %v932 = vadd.f32 %v930, %v931
    %v933 = vrot.slane %v932, 2
    %v934 = vadd.f32 %v932, %v933
    %v935 = vrot.slane %v934, 1
    %v936 = vadd.f32 %v934, %v935
    %v937 = vsel %vm382, %v936, 0.0
    %938 = vadd.xlane.f32.xlu0 %v937
    %v939 = vpop.xlane.xlu0 %938
    %v940 = vmul.f32 %v939, 0.001953125
    %v941 = vmul.f32 %v925, 0.006
    %v942 = vmul.f32 %v940, 20.0
    %v943 = vadd.f32 %v941, %v942
    %v944 = vadd.f32 %v943, 0.0
    %v945 = vld [vmem:[%s18] sm:$0xff]
    %v946 = vld [vmem:[%s18 + $0x8] sm:$0xff]
    %v947 = vld [vmem:[%s18 + $0x10] sm:$0xff]
    %v948 = vld [vmem:[%s18 + $0x18] sm:$0xff]
    %v949 = vld [vmem:[%s19] sm:$0xff]
    %v950 = vld [vmem:[%s19 + $0x8] sm:$0xff]
    %v951 = vld [vmem:[%s19 + $0x10] sm:$0xff]
    %v952 = vld [vmem:[%s19 + $0x18] sm:$0xff]
    %v953 = vld [vmem:[%s20] sm:$0x1]
    %955 = vset.pattern.permute.xlu0 0
    %956 = vperm.xlu0 %955, %v949
    %v957 = vpop.permute.xlu0 %956
    %960 = vset.pattern.permute.xlu0 0
    %961 = vperm.xlu0 %960, %v950
    %v962 = vpop.permute.xlu0 %961
    %965 = vset.pattern.permute.xlu0 0
    %966 = vperm.xlu0 %965, %v951
    %v967 = vpop.permute.xlu0 %966
    %970 = vset.pattern.permute.xlu0 0
    %971 = vperm.xlu0 %970, %v952
    %v972 = vpop.permute.xlu0 %971
    %v974 = vperm.slane %v953, 0
    %v975 = vsub.f32 %v957, %v974
    %v976 = vsub.f32 %v962, %v974
    %v977 = vsub.f32 %v967, %v974
    %v978 = vsub.f32 %v972, %v974
    %v979 = vmul.f32 %v975, %v975
    %v980 = vmul.f32 %v976, %v976
    %v981 = vmul.f32 %v977, %v977
    %v982 = vmul.f32 %v978, %v978
    %v983 = vadd.f32 %v979, 0.0
    %v984 = vadd.f32 %v980, 0.0
    %v985 = vadd.f32 %v981, 0.0
    %v986 = vadd.f32 %v982, 0.0
    %v987 = vld [vmem:[%s20 + $0x1] sm:$0x1]
    %988 = vset.pattern.permute.xlu0 1
    %989 = vperm.xlu0 %988, %v949
    %v990 = vpop.permute.xlu0 %989
    %992 = vset.pattern.permute.xlu0 1
    %993 = vperm.xlu0 %992, %v950
    %v994 = vpop.permute.xlu0 %993
    %996 = vset.pattern.permute.xlu0 1
    %997 = vperm.xlu0 %996, %v951
    %v998 = vpop.permute.xlu0 %997
    %1000 = vset.pattern.permute.xlu0 1
    %1001 = vperm.xlu0 %1000, %v952
    %v1002 = vpop.permute.xlu0 %1001
    %v1004 = vperm.slane %v987, 0
    %v1005 = vsub.f32 %v990, %v1004
    %v1006 = vsub.f32 %v994, %v1004
    %v1007 = vsub.f32 %v998, %v1004
    %v1008 = vsub.f32 %v1002, %v1004
    %v1009 = vmul.f32 %v1005, %v1005
    %v1010 = vmul.f32 %v1006, %v1006
    %v1011 = vmul.f32 %v1007, %v1007
    %v1012 = vmul.f32 %v1008, %v1008
    %v1013 = vadd.f32 %v983, %v1009
    %v1014 = vadd.f32 %v984, %v1010
    %v1015 = vadd.f32 %v985, %v1011
    %v1016 = vadd.f32 %v986, %v1012
    %v1017 = vld [vmem:[%s20 + $0x2] sm:$0x1]
    %1018 = vset.pattern.permute.xlu0 2
    %1019 = vperm.xlu0 %1018, %v949
    %v1020 = vpop.permute.xlu0 %1019
    %1022 = vset.pattern.permute.xlu0 2
    %1023 = vperm.xlu0 %1022, %v950
    %v1024 = vpop.permute.xlu0 %1023
    %1026 = vset.pattern.permute.xlu0 2
    %1027 = vperm.xlu0 %1026, %v951
    %v1028 = vpop.permute.xlu0 %1027
    %1030 = vset.pattern.permute.xlu0 2
    %1031 = vperm.xlu0 %1030, %v952
    %v1032 = vpop.permute.xlu0 %1031
    %v1034 = vperm.slane %v1017, 0
    %v1035 = vsub.f32 %v1020, %v1034
    %v1036 = vsub.f32 %v1024, %v1034
    %v1037 = vsub.f32 %v1028, %v1034
    %v1038 = vsub.f32 %v1032, %v1034
    %v1039 = vmul.f32 %v1035, %v1035
    %v1040 = vmul.f32 %v1036, %v1036
    %v1041 = vmul.f32 %v1037, %v1037
    %v1042 = vmul.f32 %v1038, %v1038
    %v1043 = vadd.f32 %v1013, %v1039
    %v1044 = vadd.f32 %v1014, %v1040
    %v1045 = vadd.f32 %v1015, %v1041
    %v1046 = vadd.f32 %v1016, %v1042
    %v1047 = vld [vmem:[%s20 + $0x3] sm:$0x1]
    %1048 = vset.pattern.permute.xlu0 3
    %1049 = vperm.xlu0 %1048, %v949
    %v1050 = vpop.permute.xlu0 %1049
    %1052 = vset.pattern.permute.xlu0 3
    %1053 = vperm.xlu0 %1052, %v950
    %v1054 = vpop.permute.xlu0 %1053
    %1056 = vset.pattern.permute.xlu0 3
    %1057 = vperm.xlu0 %1056, %v951
    %v1058 = vpop.permute.xlu0 %1057
    %1060 = vset.pattern.permute.xlu0 3
    %1061 = vperm.xlu0 %1060, %v952
    %v1062 = vpop.permute.xlu0 %1061
    %v1064 = vperm.slane %v1047, 0
    %v1065 = vsub.f32 %v1050, %v1064
    %v1066 = vsub.f32 %v1054, %v1064
    %v1067 = vsub.f32 %v1058, %v1064
    %v1068 = vsub.f32 %v1062, %v1064
    %v1069 = vmul.f32 %v1065, %v1065
    %v1070 = vmul.f32 %v1066, %v1066
    %v1071 = vmul.f32 %v1067, %v1067
    %v1072 = vmul.f32 %v1068, %v1068
    %v1073 = vadd.f32 %v1043, %v1069
    %v1074 = vadd.f32 %v1044, %v1070
    %v1075 = vadd.f32 %v1045, %v1071
    %v1076 = vadd.f32 %v1046, %v1072
    %v1077 = vsub.f32 1.0, %v1073
    %v1078 = vsub.f32 1.0, %v1074
    %v1079 = vsub.f32 1.0, %v1075
    %v1080 = vsub.f32 1.0, %v1076
    %v1081 = vmax.f32 %v1077, 0.0
    %v1082 = vmax.f32 %v1078, 0.0
    %v1083 = vmax.f32 %v1079, 0.0
    %v1084 = vmax.f32 %v1080, 0.0
    %v1085 = vmul.f32 %v945, %v1081
    %v1086 = vmul.f32 %v946, %v1082
    %v1087 = vmul.f32 %v947, %v1083
    %v1088 = vmul.f32 %v948, %v1084
    %v1089 = vpack.c.bf16 %v910, %v895
    %v1090 = vpack.c.bf16 %v1086, %v1085
    %v1091 = vpack.c.bf16 %v1088, %v1087
    %v1092 = vld [vmem:[%s21] sm:$0x1]
    %v1094 = vperm.slane %v1092, 0
    %v1097 = vsel %vm382, %v1089, 0
    %1099 = vmatpush.bf16.msra.mxu0 0
    %1100 = vmatpush.bf16.msra.mxu0 0
    %1101 = vmatpush.bf16.msra.mxu0 0
    %1102 = vmatpush.bf16.msra.mxu0 0
    %1103 = vmatpush.bf16.msra.mxu0 0
    %1104 = vmatpush.bf16.msra.mxu0 0
    %1105 = vmatpush.bf16.msra.mxu0 %v1091
    %1106 = vmatpush.bf16.msra.mxu0 %v1090
    %1107 = vmatmul.bf16.gmra.mxu0 %v1097
    %v1108 = vpop.f32.mrf.mxu0
    %v1109 = vadd.f32 %v1094, %v1108
    %v1110 = vpop.f32.mrf.mxu0
    %v1111 = vadd.f32 %v1094, %v1110
    %1112 = vdwg.mxu0
    %v1113 = vxor.u32 %v1109, 2147483648
    %v1114 = vxor.u32 %v1111, 2147483648
    %v1115 = vmul.f32 %v1113, 1.442695
    %v1116 = vpow.pop %v1115
    %v1117 = vmul.f32 %v1114, 1.442695
    %v1118 = vpow.pop %v1117
    %v1119 = vadd.f32 %v1116, 1.0
    %v1120 = vadd.f32 %v1118, 1.0
    %v1121 = vrcp.pop %v1119
    %v1122 = vmul.f32 %v1119, %v1121
    %v1123 = vsub.f32 1.0, %v1122
    %v1124 = vmul.f32 %v1121, %v1123
    %v1125 = vadd.f32 %v1121, %v1124
    %vm1126 = vweird.f32 %v1119
    %vm1127 = vweird.f32 %v1121
    %vm1128 = vmor %vm1126, %vm1127
    %v1129 = vsel %vm1128, %v1121, %v1125
    %v1130 = vand.u32 2147483647, %v1119
    %vm1131 = vcmp.eq.f32.partialorder %v1130, 8.507059e+37
    %v1132 = vand.u32 %v1119, 2147483648
    %v1133 = vor.u32 1.1754944e-38, %v1132
    %v1134 = vsel %vm1131, %v1133, %v1129
    %v1135 = vmul.f32 1.0, %v1134
    %v1136 = vrcp.pop %v1120
    %v1137 = vmul.f32 %v1120, %v1136
    %v1138 = vsub.f32 1.0, %v1137
    %v1139 = vmul.f32 %v1136, %v1138
    %v1140 = vadd.f32 %v1136, %v1139
    %vm1141 = vweird.f32 %v1120
    %vm1142 = vweird.f32 %v1136
    %vm1143 = vmor %vm1141, %vm1142
    %v1144 = vsel %vm1143, %v1136, %v1140
    %v1145 = vand.u32 2147483647, %v1120
    %vm1146 = vcmp.eq.f32.partialorder %v1145, 8.507059e+37
    %v1147 = vand.u32 %v1120, 2147483648
    %v1148 = vor.u32 1.1754944e-38, %v1147
    %v1149 = vsel %vm1146, %v1148, %v1144
    %v1150 = vmul.f32 1.0, %v1149
    %v1151 = vmul.f32 %v1081, %v1081
    %v1152 = vmul.f32 %v1082, %v1082
    %v1153 = vmul.f32 %v1083, %v1083
    %v1154 = vmul.f32 %v1084, %v1084
    %v1155 = vsel %vm382, %v1151, 0.0
    %v1156 = vsel %vm382, %v1152, 0.0
    %v1157 = vadd.f32 %v1155, %v1156
    %v1158 = vsel %vm382, %v1153, 0.0
    %v1159 = vadd.f32 %v1157, %v1158
    %v1160 = vsel %vm382, %v1154, 0.0
    %v1161 = vadd.f32 %v1159, %v1160
    %v1162 = vrot.slane %v1161, 4
    %v1163 = vadd.f32 %v1161, %v1162
    %v1164 = vrot.slane %v1163, 2
    %v1165 = vadd.f32 %v1163, %v1164
    %v1166 = vrot.slane %v1165, 1
    %v1167 = vadd.f32 %v1165, %v1166
    %v1168 = vsel %vm382, %v1167, 0.0
    %1169 = vadd.xlane.f32.xlu0 %v1168
    %v1170 = vpop.xlane.xlu0 %1169
    %v1171 = vmul.f32 %v1170, 0.0009765625
    %v1172 = vmul.f32 %v945, %v945
    %v1173 = vmul.f32 %v946, %v946
    %v1174 = vmul.f32 %v947, %v947
    %v1175 = vmul.f32 %v948, %v948
    %v1176 = vsel %vm382, %v1172, 0.0
    %v1177 = vsel %vm382, %v1173, 0.0
    %v1178 = vadd.f32 %v1176, %v1177
    %v1179 = vsel %vm382, %v1174, 0.0
    %v1180 = vadd.f32 %v1178, %v1179
    %v1181 = vsel %vm382, %v1175, 0.0
    %v1182 = vadd.f32 %v1180, %v1181
    %v1183 = vrot.slane %v1182, 4
    %v1184 = vadd.f32 %v1182, %v1183
    %v1185 = vrot.slane %v1184, 2
    %v1186 = vadd.f32 %v1184, %v1185
    %v1187 = vrot.slane %v1186, 1
    %v1188 = vadd.f32 %v1186, %v1187
    %v1189 = vsel %vm382, %v1188, 0.0
    %1190 = vadd.xlane.f32.xlu0 %v1189
    %v1191 = vpop.xlane.xlu0 %1190
    %v1192 = vmul.f32 %v1191, 0.0009765625
    %v1193 = vmul.f32 %v1171, 0.006
    %v1194 = vmul.f32 %v1192, 20.0
    %v1195 = vadd.f32 %v1193, %v1194
    %v1196 = vadd.f32 %v944, %v1195
    %v1197 = vld [vmem:[%s22] sm:$0xff]
    %v1198 = vld [vmem:[%s22 + $0x8] sm:$0xff]
    %v1199 = vld [vmem:[%s22 + $0x10] sm:$0xff]
    %v1200 = vld [vmem:[%s22 + $0x18] sm:$0xff]
    %v1201 = vld [vmem:[%s23] sm:$0xff]
    %v1202 = vld [vmem:[%s23 + $0x8] sm:$0xff]
    %v1203 = vld [vmem:[%s23 + $0x10] sm:$0xff]
    %v1204 = vld [vmem:[%s23 + $0x18] sm:$0xff]
    %v1205 = vld [vmem:[%s24] sm:$0x1]
    %1207 = vset.pattern.permute.xlu0 0
    %1208 = vperm.xlu0 %1207, %v1201
    %v1209 = vpop.permute.xlu0 %1208
    %1212 = vset.pattern.permute.xlu0 0
    %1213 = vperm.xlu0 %1212, %v1202
    %v1214 = vpop.permute.xlu0 %1213
    %1217 = vset.pattern.permute.xlu0 0
    %1218 = vperm.xlu0 %1217, %v1203
    %v1219 = vpop.permute.xlu0 %1218
    %1222 = vset.pattern.permute.xlu0 0
    %1223 = vperm.xlu0 %1222, %v1204
    %v1224 = vpop.permute.xlu0 %1223
    %v1226 = vperm.slane %v1205, 0
    %v1227 = vsub.f32 %v1209, %v1226
    %v1228 = vsub.f32 %v1214, %v1226
    %v1229 = vsub.f32 %v1219, %v1226
    %v1230 = vsub.f32 %v1224, %v1226
    %v1231 = vmul.f32 %v1227, %v1227
    %v1232 = vmul.f32 %v1228, %v1228
    %v1233 = vmul.f32 %v1229, %v1229
    %v1234 = vmul.f32 %v1230, %v1230
    %v1235 = vadd.f32 %v1231, 0.0
    %v1236 = vadd.f32 %v1232, 0.0
    %v1237 = vadd.f32 %v1233, 0.0
    %v1238 = vadd.f32 %v1234, 0.0
    %v1239 = vld [vmem:[%s24 + $0x1] sm:$0x1]
    %1240 = vset.pattern.permute.xlu0 1
    %1241 = vperm.xlu0 %1240, %v1201
    %v1242 = vpop.permute.xlu0 %1241
    %1244 = vset.pattern.permute.xlu0 1
    %1245 = vperm.xlu0 %1244, %v1202
    %v1246 = vpop.permute.xlu0 %1245
    %1248 = vset.pattern.permute.xlu0 1
    %1249 = vperm.xlu0 %1248, %v1203
    %v1250 = vpop.permute.xlu0 %1249
    %1252 = vset.pattern.permute.xlu0 1
    %1253 = vperm.xlu0 %1252, %v1204
    %v1254 = vpop.permute.xlu0 %1253
    %v1256 = vperm.slane %v1239, 0
    %v1257 = vsub.f32 %v1242, %v1256
    %v1258 = vsub.f32 %v1246, %v1256
    %v1259 = vsub.f32 %v1250, %v1256
    %v1260 = vsub.f32 %v1254, %v1256
    %v1261 = vmul.f32 %v1257, %v1257
    %v1262 = vmul.f32 %v1258, %v1258
    %v1263 = vmul.f32 %v1259, %v1259
    %v1264 = vmul.f32 %v1260, %v1260
    %v1265 = vadd.f32 %v1235, %v1261
    %v1266 = vadd.f32 %v1236, %v1262
    %v1267 = vadd.f32 %v1237, %v1263
    %v1268 = vadd.f32 %v1238, %v1264
    %v1269 = vld [vmem:[%s24 + $0x2] sm:$0x1]
    %1270 = vset.pattern.permute.xlu0 2
    %1271 = vperm.xlu0 %1270, %v1201
    %v1272 = vpop.permute.xlu0 %1271
    %1274 = vset.pattern.permute.xlu0 2
    %1275 = vperm.xlu0 %1274, %v1202
    %v1276 = vpop.permute.xlu0 %1275
    %1278 = vset.pattern.permute.xlu0 2
    %1279 = vperm.xlu0 %1278, %v1203
    %v1280 = vpop.permute.xlu0 %1279
    %1282 = vset.pattern.permute.xlu0 2
    %1283 = vperm.xlu0 %1282, %v1204
    %v1284 = vpop.permute.xlu0 %1283
    %v1286 = vperm.slane %v1269, 0
    %v1287 = vsub.f32 %v1272, %v1286
    %v1288 = vsub.f32 %v1276, %v1286
    %v1289 = vsub.f32 %v1280, %v1286
    %v1290 = vsub.f32 %v1284, %v1286
    %v1291 = vmul.f32 %v1287, %v1287
    %v1292 = vmul.f32 %v1288, %v1288
    %v1293 = vmul.f32 %v1289, %v1289
    %v1294 = vmul.f32 %v1290, %v1290
    %v1295 = vadd.f32 %v1265, %v1291
    %v1296 = vadd.f32 %v1266, %v1292
    %v1297 = vadd.f32 %v1267, %v1293
    %v1298 = vadd.f32 %v1268, %v1294
    %v1299 = vld [vmem:[%s24 + $0x3] sm:$0x1]
    %1300 = vset.pattern.permute.xlu0 3
    %1301 = vperm.xlu0 %1300, %v1201
    %v1302 = vpop.permute.xlu0 %1301
    %1304 = vset.pattern.permute.xlu0 3
    %1305 = vperm.xlu0 %1304, %v1202
    %v1306 = vpop.permute.xlu0 %1305
    %1308 = vset.pattern.permute.xlu0 3
    %1309 = vperm.xlu0 %1308, %v1203
    %v1310 = vpop.permute.xlu0 %1309
    %1312 = vset.pattern.permute.xlu0 3
    %1313 = vperm.xlu0 %1312, %v1204
    %v1314 = vpop.permute.xlu0 %1313
    %v1316 = vperm.slane %v1299, 0
    %v1317 = vsub.f32 %v1302, %v1316
    %v1318 = vsub.f32 %v1306, %v1316
    %v1319 = vsub.f32 %v1310, %v1316
    %v1320 = vsub.f32 %v1314, %v1316
    %v1321 = vmul.f32 %v1317, %v1317
    %v1322 = vmul.f32 %v1318, %v1318
    %v1323 = vmul.f32 %v1319, %v1319
    %v1324 = vmul.f32 %v1320, %v1320
    %v1325 = vadd.f32 %v1295, %v1321
    %v1326 = vadd.f32 %v1296, %v1322
    %v1327 = vadd.f32 %v1297, %v1323
    %v1328 = vadd.f32 %v1298, %v1324
    %v1329 = vsub.f32 1.0, %v1325
    %v1330 = vsub.f32 1.0, %v1326
    %v1331 = vsub.f32 1.0, %v1327
    %v1332 = vsub.f32 1.0, %v1328
    %v1333 = vmax.f32 %v1329, 0.0
    %v1334 = vmax.f32 %v1330, 0.0
    %v1335 = vmax.f32 %v1331, 0.0
    %v1336 = vmax.f32 %v1332, 0.0
    %v1337 = vmul.f32 %v1197, %v1333
    %v1338 = vmul.f32 %v1198, %v1334
    %v1339 = vmul.f32 %v1199, %v1335
    %v1340 = vmul.f32 %v1200, %v1336
    %v1341 = vpack.c.bf16 %v1150, %v1135
    %v1342 = vpack.c.bf16 %v1338, %v1337
    %v1343 = vpack.c.bf16 %v1340, %v1339
    %v1344 = vld [vmem:[%s25] sm:$0x1]
    %v1346 = vperm.slane %v1344, 0
    %v1349 = vsel %vm382, %v1341, 0
    %1351 = vmatpush.bf16.msra.mxu0 0
    %1352 = vmatpush.bf16.msra.mxu0 0
    %1353 = vmatpush.bf16.msra.mxu0 0
    %1354 = vmatpush.bf16.msra.mxu0 0
    %1355 = vmatpush.bf16.msra.mxu0 0
    %1356 = vmatpush.bf16.msra.mxu0 0
    %1357 = vmatpush.bf16.msra.mxu0 %v1343
    %1358 = vmatpush.bf16.msra.mxu0 %v1342
    %1359 = vmatmul.bf16.gmra.mxu0 %v1349
    %v1360 = vpop.f32.mrf.mxu0
    %v1361 = vadd.f32 %v1346, %v1360
    %v1362 = vpop.f32.mrf.mxu0
    %v1363 = vadd.f32 %v1346, %v1362
    %1364 = vdwg.mxu0
    %v1365 = vmul.f32 %v1333, %v1333
    %v1366 = vmul.f32 %v1334, %v1334
    %v1367 = vmul.f32 %v1335, %v1335
    %v1368 = vmul.f32 %v1336, %v1336
    %v1369 = vsel %vm175, %v1365, 0.0
    %v1370 = vsel %vm175, %v1366, 0.0
    %v1371 = vadd.f32 %v1369, %v1370
    %v1372 = vsel %vm175, %v1367, 0.0
    %v1373 = vadd.f32 %v1371, %v1372
    %v1374 = vsel %vm175, %v1368, 0.0
    %v1375 = vadd.f32 %v1373, %v1374
    %v1376 = vrot.slane %v1375, 4
    %v1377 = vadd.f32 %v1375, %v1376
    %v1378 = vrot.slane %v1377, 2
    %v1379 = vadd.f32 %v1377, %v1378
    %v1380 = vrot.slane %v1379, 1
    %v1381 = vadd.f32 %v1379, %v1380
    %v1382 = vsel %vm175, %v1381, 0.0
    %1383 = vadd.xlane.f32.xlu0 %v1382
    %v1384 = vpop.xlane.xlu0 %1383
    %v1385 = vmul.f32 %v1384, 0.001953125
    %v1386 = vmul.f32 %v1197, %v1197
    %v1387 = vmul.f32 %v1198, %v1198
    %v1388 = vmul.f32 %v1199, %v1199
    %v1389 = vmul.f32 %v1200, %v1200
    %v1390 = vsel %vm175, %v1386, 0.0
    %v1391 = vsel %vm175, %v1387, 0.0
    %v1392 = vadd.f32 %v1390, %v1391
    %v1393 = vsel %vm175, %v1388, 0.0
    %v1394 = vadd.f32 %v1392, %v1393
    %v1395 = vsel %vm175, %v1389, 0.0
    %v1396 = vadd.f32 %v1394, %v1395
    %v1397 = vrot.slane %v1396, 4
    %v1398 = vadd.f32 %v1396, %v1397
    %v1399 = vrot.slane %v1398, 2
    %v1400 = vadd.f32 %v1398, %v1399
    %v1401 = vrot.slane %v1400, 1
    %v1402 = vadd.f32 %v1400, %v1401
    %v1403 = vsel %vm175, %v1402, 0.0
    %1404 = vadd.xlane.f32.xlu0 %v1403
    %v1405 = vpop.xlane.xlu0 %1404
    %v1406 = vmul.f32 %v1405, 0.001953125
    %v1407 = vmul.f32 %v1385, 0.006
    %v1408 = vmul.f32 %v1406, 20.0
    %v1409 = vadd.f32 %v1407, %v1408
    %v1410 = vadd.f32 %v1196, %v1409
    %1411 = vst.msk [vmem:[#allocation2] sm:$0xff] %vm175, %v1361
    %1412 = vst.msk [vmem:[#allocation2 + $0x8] sm:$0xff] %vm175, %v1363
    %vm1413 = vcmask 0
    %1414 = vst.msk [vmem:[#allocation4] sm:$0x1] %vm1413, %v1410
    // Predicated region
    $region106: #{complete_net_forward.1} parent=1 // pred_check
      _
    $region107: #{complete_net_forward.1} parent=1 // pred_check_branch
      %1416 = sbr.rel (0) target = $region109
    $region108: #{complete_net_forward.1} parent=1 // pred_region
      %1418 = vsyncadd [#allocation3], 0
      %s1419 = sshll.u32 [#allocation2], 4
      %s1420 = int_to_ptr.vmem [resolvable:$true] %s1419
      %s1421 = sshll.u32 %s26, 4
      %s1422 = int_to_ptr.hbm [resolvable:$true] %s1421
      %1427 = dma.vmem_to_hbm [thread:$0]  %s1420, 256, %s1422, [#allocation3], 128, 128, 8
    $region109: #{complete_net_forward.1} parent=1 // pred_fallthru
      _
    // Predicated region
    $region110: #{complete_net_forward.1} parent=1 // pred_check
      _
    $region111: #{complete_net_forward.1} parent=1 // pred_check_branch
      %1429 = sbr.rel (0) target = $region113
    $region112: #{complete_net_forward.1} parent=1 // pred_region
      %1431 = vsyncadd [#allocation5], 0
      %s1433 = sshll.u32 [#allocation4], 4
      %s1434 = int_to_ptr.vmem [resolvable:$true] %s1433
      %s1435 = sshll.u32 %s27, 4
      %s1436 = int_to_ptr.hbm [resolvable:$true] %s1435
      %1438 = dma.vmem_to_hbm [thread:$0]  %s1434, 16, %s1436, [#allocation5]
    $region113: #{complete_net_forward.1} parent=1 // pred_fallthru
      _
    // Predicated region
    $region114: #{complete_net_forward.1} parent=1 // pred_check
      _
    $region115: #{complete_net_forward.1} parent=1 // pred_check_branch
      %1440 = sbr.rel (0) target = $region117
    $region116: #{complete_net_forward.1} parent=1 // pred_region
      %1442 = dma.done [#allocation3], 256
    $region117: #{complete_net_forward.1} parent=1 // pred_fallthru
      _
    // Predicated region
    $region118: #{complete_net_forward.1} parent=1 // pred_check
      _
    $region119: #{complete_net_forward.1} parent=1 // pred_check_branch
      %1444 = sbr.rel (0) target = $region121
    $region120: #{complete_net_forward.1} parent=1 // pred_region
      %1446 = dma.done [#allocation5], 16
    $region121: #{complete_net_forward.1} parent=1 // pred_fallthru
      _
    %1447 = vsyncpa [#allocation3], 1
    %1448 = vsyncpa [#allocation5], 1

</llo_original>
